<compile_context>
chip_gen: v5e
topology: v5e:2x2
jax: 0.10.0
libtpu: 0.0.40
codegen_flags: <defaults>
</compile_context>

<pallas_src>
import math

import jax
import jax.numpy as jnp
from jax import lax
from jax.experimental import pallas as pl
from jax.experimental.pallas import tpu as pltpu


# ---------------------------------------------------------------------------
# Kernel A: fused K/V projection (one MXU pass over each x tile).
# ---------------------------------------------------------------------------
def _kv_proj_kernel(x_ref, wkv_ref, k_ref, v_ref):
    d_out = k_ref.shape[-1]
    # x @ [Wk^T | Wv^T]  (weights pre-transposed in the wrapper -> no XLU work)
    kv = jnp.dot(x_ref[...], wkv_ref[...], preferred_element_type=jnp.float32)
    k_ref[...] = kv[:, :d_out].astype(k_ref.dtype)
    v_ref[...] = kv[:, d_out:].astype(v_ref.dtype)


# ---------------------------------------------------------------------------
# Kernel B: per query tile — Q projection, energies, softmax, A@V, out-proj.
# ---------------------------------------------------------------------------
def _attention_kernel(x_ref, k_ref, v_ref, wq_ref, wo_ref, y_ref, att_ref):
    cd = k_ref.dtype  # MXU input dtype (bf16); accumulation is always f32.

    # Q projection for this query tile (plain x @ Wq, weights pre-transposed).
    q = jnp.dot(x_ref[...], wq_ref[...], preferred_element_type=jnp.float32)

    # energies = Q @ K^T without materializing K^T: contract last axes of both.
    energies = lax.dot_general(
        q.astype(cd), k_ref[...],
        dimension_numbers=(((1,), (1,)), ((), ())),
        preferred_element_type=jnp.float32)                      # [tq, T] f32

    # Numerically stable softmax; VPU/EUP math stays in f32 (v5e-safe).
    m = jnp.max(energies, axis=-1, keepdims=True)
    p = jnp.exp(energies - m)
    denom = jnp.sum(p, axis=-1, keepdims=True)
    att = p * pl.reciprocal(denom, approx=True)                  # EUP, not VPU
    att_ref[...] = att.astype(att_ref.dtype)

    # Dropout(p=0.5) is identity in eval mode (inference semantics).
    y = jnp.dot(att.astype(cd), v_ref[...], preferred_element_type=jnp.float32)
    out = jnp.dot(y.astype(cd), wo_ref[...], preferred_element_type=jnp.float32)
    y_ref[...] = out.astype(y_ref.dtype)


# ---------------------------------------------------------------------------
# Wrapper
# ---------------------------------------------------------------------------
def _pick_tile(n, max_tile=256):
    """Largest tile <= max_tile that divides n with a sublane-friendly size;
    falls back to the full extent (single block)."""
    if n <= max_tile:
        return n
    for t in (512, 256, 128, 64, 32, 16, 8):
        if t <= max_tile and n % t == 0:
            return t
    return n


def _vmem_limit(block_bytes):
    # 2x for double-buffering + slack for in-kernel intermediates, clamped so
    # the request is valid on every generation (>= default, <= v7x physical).
    est = 2 * block_bytes + (8 << 20)
    return int(min(max(est, 32 << 20), 64 << 20))


def self_attention_pallas(x, wk, wq, wv, wo, *,
                          compute_dtype=jnp.bfloat16, q_tile=128):
    """x: [T, Din]; wk/wq/wv: [Dout, Din]; wo: [Din, Dout] (PyTorch layout).
    Returns (y [T, Din], att_weights [T, T]) matching the PyTorch module."""
    T, d_in = x.shape
    d_out = wk.shape[0]
    cd = compute_dtype
    csize = jnp.dtype(cd).itemsize
    osize = jnp.dtype(x.dtype).itemsize

    # Pre-transpose / pack weights once on the host side (lane-dense, no
    # in-kernel XLU transposes).
    wq_t = wq.T.astype(cd)                                     # [Din, Dout]
    wkv_t = jnp.concatenate([wk.T, wv.T], axis=1).astype(cd)   # [Din, 2*Dout]
    wo_t = wo.T.astype(cd)                                     # [Dout, Din]
    x_c = x.astype(cd)

    # ---------------- Kernel A: K/V projection over row tiles ----------------
    tr = _pick_tile(T, q_tile)
    a_bytes = (tr * d_in + d_in * 2 * d_out + 2 * tr * d_out) * csize
    k_full, v_full = pl.pallas_call(
        _kv_proj_kernel,
        out_shape=(jax.ShapeDtypeStruct((T, d_out), cd),
                   jax.ShapeDtypeStruct((T, d_out), cd)),
        grid_spec=pltpu.PrefetchScalarGridSpec(
            num_scalar_prefetch=0,
            grid=(T // tr,),
            in_specs=[pl.BlockSpec((tr, d_in), lambda i: (i, 0)),
                      pl.BlockSpec((d_in, 2 * d_out), lambda i: (0, 0))],
            out_specs=(pl.BlockSpec((tr, d_out), lambda i: (i, 0)),
                       pl.BlockSpec((tr, d_out), lambda i: (i, 0)))),
        compiler_params=pltpu.CompilerParams(
            dimension_semantics=("parallel",),
            vmem_limit_bytes=_vmem_limit(a_bytes)),
    )(x_c, wkv_t)

    # -------------- Kernel B: attention + out-proj over query tiles ----------
    tq = _pick_tile(T, q_tile)
    b_bytes = ((tq * d_in + 2 * T * d_out + 2 * d_in * d_out) * csize
               + tq * d_in * osize          # y out tile
               + tq * T * 4                 # att out tile (f32)
               + 2 * tq * T * 4)            # energies / softmax intermediates
    y, att = pl.pallas_call(
        _attention_kernel,
        out_shape=(jax.ShapeDtypeStruct((T, d_in), x.dtype),
                   jax.ShapeDtypeStruct((T, T), jnp.float32)),
        grid_spec=pltpu.PrefetchScalarGridSpec(
            num_scalar_prefetch=0,
            grid=(T // tq,),
            in_specs=[pl.BlockSpec((tq, d_in), lambda i: (i, 0)),   # x tile
                      pl.BlockSpec((T, d_out), lambda i: (0, 0)),   # K (resident)
                      pl.BlockSpec((T, d_out), lambda i: (0, 0)),   # V (resident)
                      pl.BlockSpec((d_in, d_out), lambda i: (0, 0)),  # Wq^T
                      pl.BlockSpec((d_out, d_in), lambda i: (0, 0))],  # Wo^T
            out_specs=(pl.BlockSpec((tq, d_in), lambda i: (i, 0)),
                       pl.BlockSpec((tq, T), lambda i: (i, 0)))),
        compiler_params=pltpu.CompilerParams(
            dimension_semantics=("parallel",),
            vmem_limit_bytes=_vmem_limit(b_bytes)),
    )(x_c, k_full, v_full, wq_t, wo_t)

    return y, att


# ---------------------------------------------------------------------------
# Reference / init helpers
# ---------------------------------------------------------------------------
def _linear_init(key, out_features, in_features):
    """Deterministic nn.Linear default init: U(-1/sqrt(in), 1/sqrt(in))."""
    bound = 1.0 / math.sqrt(in_features)
    return jax.random.uniform(key, (out_features, in_features),
                              dtype=jnp.float32, minval=-bound, maxval=bound)


def _reference(x, wk, wq, wv, wo, compute_dtype):
    """Pure-JAX forward with the same bf16-input / f32-accumulate casting as
    the kernel (softmax in f32), for a tight correctness check."""
    cd = compute_dtype
    xc = x.astype(cd)
    k = jnp.dot(xc, wk.T.astype(cd), preferred_element_type=jnp.float32).astype(cd)
    q = jnp.dot(xc, wq.T.astype(cd), preferred_element_type=jnp.float32).astype(cd)
    v = jnp.dot(xc, wv.T.astype(cd), preferred_element_type=jnp.float32).astype(cd)
    e = jnp.dot(q, k.T, preferred_element_type=jnp.float32)
    att = jax.nn.softmax(e, axis=-1)
    y = jnp.dot(att.astype(cd), v, preferred_element_type=jnp.float32)
    out = jnp.dot(y.astype(cd), wo.T.astype(cd), preferred_element_type=jnp.float32)
    return out.astype(x.dtype), att


if __name__ == "__main__":
    # Small but lane-dense shapes consistent with the module (x is [T, input_size]).
    T = 256
    input_size = 256
    output_size = 128  # heads=1 -> single head of width output_size

    key = jax.random.PRNGKey(0)
    kx, kk, kq, kv, ko = jax.random.split(key, 5)

    x = jax.random.normal(kx, (T, input_size), dtype=jnp.float32)
    wk = _linear_init(kk, output_size, input_size)   # Wk[0].weight
    wq = _linear_init(kq, output_size, input_size)   # Wq[0].weight
    wv = _linear_init(kv, output_size, input_size)   # Wv[0].weight
    wo = _linear_init(ko, input_size, output_size)   # out.weight

    fwd = jax.jit(self_attention_pallas)
    y, att = fwd(x, wk, wq, wv, wo)
    jax.block_until_ready((y, att))

    y_ref, att_ref = _reference(x, wk, wq, wv, wo, jnp.bfloat16)
    assert y.shape == (T, input_size) and att.shape == (T, T)
    assert jnp.allclose(att, att_ref, atol=1e-2, rtol=1e-2), "att mismatch"
    assert jnp.allclose(y, y_ref, atol=1e-2, rtol=1e-2), "y mismatch"
    assert jnp.allclose(jnp.sum(att, axis=-1), 1.0, atol=1e-3), "softmax rows"

    print("KERNEL_OK")
</pallas_src>

<mosaic_0001>
module attributes {stable_mosaic.version = 11 : i64} {
  func.func @_attention_kernel(%arg0: i32, %arg1: memref<128x256xbf16, #tpu.memory_space<vmem>>, %arg2: memref<256x128xbf16, #tpu.memory_space<vmem>>, %arg3: memref<256x128xbf16, #tpu.memory_space<vmem>>, %arg4: memref<256x128xbf16, #tpu.memory_space<vmem>>, %arg5: memref<128x256xbf16, #tpu.memory_space<vmem>>, %arg6: memref<128x256xf32, #tpu.memory_space<vmem>>, %arg7: memref<128x256xf32, #tpu.memory_space<vmem>>) attributes {dimension_semantics = [#tpu.dimension_semantics<parallel>], iteration_bounds = array<i64: 2>, scalar_prefetch = 0 : i64, scratch_operands = 0 : i64, tpu.core_type = #tpu.core_type<tc>, window_params = [{transform_indices = @transform_0, window_bounds = array<i64: 128, 256>}, {pipeline_mode = #tpu.pipeline_mode<synchronous>, transform_indices = @transform_1, window_bounds = array<i64: 256, 128>}, {pipeline_mode = #tpu.pipeline_mode<synchronous>, transform_indices = @transform_2, window_bounds = array<i64: 256, 128>}, {pipeline_mode = #tpu.pipeline_mode<synchronous>, transform_indices = @transform_3, window_bounds = array<i64: 256, 128>}, {pipeline_mode = #tpu.pipeline_mode<synchronous>, transform_indices = @transform_4, window_bounds = array<i64: 128, 256>}, {transform_indices = @transform_5, window_bounds = array<i64: 128, 256>}, {transform_indices = @transform_6, window_bounds = array<i64: 128, 256>}]} {
    %c0 = arith.constant 0 : index
    %c0_0 = arith.constant 0 : index
    %0 = vector.load %arg1[%c0, %c0_0] : memref<128x256xbf16, #tpu.memory_space<vmem>>, vector<128x256xbf16>
    %c0_1 = arith.constant 0 : index
    %c0_2 = arith.constant 0 : index
    %1 = vector.load %arg4[%c0_1, %c0_2] : memref<256x128xbf16, #tpu.memory_space<vmem>>, vector<256x128xbf16>
    %cst = arith.constant dense<0.000000e+00> : vector<128x128xf32>
    %2 = tpu.matmul %0, %1, %cst {dimension_numbers = #tpu.dot_dimension_numbers<[1], [0], [0], [1], [0, 0, 1, 1], [], []>} : vector<128x256xbf16>, vector<256x128xbf16>, vector<128x128xf32> -> vector<128x128xf32>
    %3 = arith.truncf %2 : vector<128x128xf32> to vector<128x128xbf16>
    %c0_3 = arith.constant 0 : index
    %c0_4 = arith.constant 0 : index
    %4 = vector.load %arg2[%c0_3, %c0_4] : memref<256x128xbf16, #tpu.memory_space<vmem>>, vector<256x128xbf16>
    %cst_5 = arith.constant dense<0.000000e+00> : vector<128x256xf32>
    %5 = tpu.matmul %3, %4, %cst_5 {dimension_numbers = #tpu.dot_dimension_numbers<[1], [1], [0], [0], [0, 0, 1, 0], [], []>} : vector<128x128xbf16>, vector<256x128xbf16>, vector<128x256xf32> -> vector<128x256xf32>
    %cst_6 = arith.constant dense<0xFF800000> : vector<128xf32>
    %6 = vector.multi_reduction <maximumf>, %5, %cst_6 [1] : vector<128x256xf32> to vector<128xf32>
    %7 = vector.shape_cast %6 : vector<128xf32> to vector<128x1xf32>
    %8 = vector.broadcast %7 : vector<128x1xf32> to vector<128x256xf32>
    %9 = arith.subf %5, %8 : vector<128x256xf32>
    %10 = math.exp %9 : vector<128x256xf32>
    %cst_7 = arith.constant dense<0.000000e+00> : vector<128xf32>
    %11 = vector.multi_reduction <add>, %10, %cst_7 [1] : vector<128x256xf32> to vector<128xf32>
    %12 = vector.shape_cast %11 : vector<128xf32> to vector<128x1xf32>
    %13 = tpu.reciprocal %12 {approx = true} : vector<128x1xf32> -> vector<128x1xf32>
    %14 = vector.broadcast %13 : vector<128x1xf32> to vector<128x256xf32>
    %15 = arith.mulf %10, %14 : vector<128x256xf32>
    %c0_8 = arith.constant 0 : index
    %c0_9 = arith.constant 0 : index
    %16 = vector.load %arg7[%c0_8, %c0_9] : memref<128x256xf32, #tpu.memory_space<vmem>>, vector<128x256xf32>
    tpu.vector_store %arg7[%c0_8, %c0_9], %15 {strides = array<i32>} : memref<128x256xf32, #tpu.memory_space<vmem>>, vector<128x256xf32>,
    %17 = arith.truncf %15 : vector<128x256xf32> to vector<128x256xbf16>
    %c0_10 = arith.constant 0 : index
    %c0_11 = arith.constant 0 : index
    %18 = vector.load %arg3[%c0_10, %c0_11] : memref<256x128xbf16, #tpu.memory_space<vmem>>, vector<256x128xbf16>
    %cst_12 = arith.constant dense<0.000000e+00> : vector<128x128xf32>
    %19 = tpu.matmul %17, %18, %cst_12 {dimension_numbers = #tpu.dot_dimension_numbers<[1], [0], [0], [1], [0, 0, 1, 1], [], []>} : vector<128x256xbf16>, vector<256x128xbf16>, vector<128x128xf32> -> vector<128x128xf32>
    %20 = arith.truncf %19 : vector<128x128xf32> to vector<128x128xbf16>
    %c0_13 = arith.constant 0 : index
    %c0_14 = arith.constant 0 : index
    %21 = vector.load %arg5[%c0_13, %c0_14] : memref<128x256xbf16, #tpu.memory_space<vmem>>, vector<128x256xbf16>
    %cst_15 = arith.constant dense<0.000000e+00> : vector<128x256xf32>
    %22 = tpu.matmul %20, %21, %cst_15 {dimension_numbers = #tpu.dot_dimension_numbers<[1], [0], [0], [1], [0, 0, 1, 1], [], []>} : vector<128x128xbf16>, vector<128x256xbf16>, vector<128x256xf32> -> vector<128x256xf32>
    %c0_16 = arith.constant 0 : index
    %c0_17 = arith.constant 0 : index
    %23 = vector.load %arg6[%c0_16, %c0_17] : memref<128x256xf32, #tpu.memory_space<vmem>>, vector<128x256xf32>
    tpu.vector_store %arg6[%c0_16, %c0_17], %22 {strides = array<i32>} : memref<128x256xf32, #tpu.memory_space<vmem>>, vector<128x256xf32>,
    return
  }
  func.func @transform_0(%arg0: i32) -> (i32, i32) {
    %c0_i32 = arith.constant 0 : i32
    %c0_i32_0 = arith.constant 0 : i32
    return %arg0, %c0_i32 : i32, i32
  }
  func.func @transform_1(%arg0: i32) -> (i32, i32) {
    %c0_i32 = arith.constant 0 : i32
    %c0_i32_0 = arith.constant 0 : i32
    %c0_i32_1 = arith.constant 0 : i32
    return %c0_i32, %c0_i32_0 : i32, i32
  }
  func.func @transform_2(%arg0: i32) -> (i32, i32) {
    %c0_i32 = arith.constant 0 : i32
    %c0_i32_0 = arith.constant 0 : i32
    %c0_i32_1 = arith.constant 0 : i32
    return %c0_i32, %c0_i32_0 : i32, i32
  }
  func.func @transform_3(%arg0: i32) -> (i32, i32) {
    %c0_i32 = arith.constant 0 : i32
    %c0_i32_0 = arith.constant 0 : i32
    %c0_i32_1 = arith.constant 0 : i32
    return %c0_i32, %c0_i32_0 : i32, i32
  }
  func.func @transform_4(%arg0: i32) -> (i32, i32) {
    %c0_i32 = arith.constant 0 : i32
    %c0_i32_0 = arith.constant 0 : i32
    %c0_i32_1 = arith.constant 0 : i32
    return %c0_i32, %c0_i32_0 : i32, i32
  }
  func.func @transform_5(%arg0: i32) -> (i32, i32) {
    %c0_i32 = arith.constant 0 : i32
    %c0_i32_0 = arith.constant 0 : i32
    return %arg0, %c0_i32 : i32, i32
  }
  func.func @transform_6(%arg0: i32) -> (i32, i32) {
    %c0_i32 = arith.constant 0 : i32
    %c0_i32_0 = arith.constant 0 : i32
    return %arg0, %c0_i32 : i32, i32
  }
}

module attributes {stable_mosaic.version = 11 : i64} {
  func.func @_kv_proj_kernel(%arg0: i32, %arg1: memref<128x256xbf16, #tpu.memory_space<vmem>>, %arg2: memref<256x256xbf16, #tpu.memory_space<vmem>>, %arg3: memref<128x128xbf16, #tpu.memory_space<vmem>>, %arg4: memref<128x128xbf16, #tpu.memory_space<vmem>>) attributes {dimension_semantics = [#tpu.dimension_semantics<parallel>], iteration_bounds = array<i64: 2>, scalar_prefetch = 0 : i64, scratch_operands = 0 : i64, tpu.core_type = #tpu.core_type<tc>, window_params = [{transform_indices = @transform_0, window_bounds = array<i64: 128, 256>}, {pipeline_mode = #tpu.pipeline_mode<synchronous>, transform_indices = @transform_1, window_bounds = array<i64: 256, 256>}, {transform_indices = @transform_2, window_bounds = array<i64: 128, 128>}, {transform_indices = @transform_3, window_bounds = array<i64: 128, 128>}]} {
    %c0 = arith.constant 0 : index
    %c0_0 = arith.constant 0 : index
    %0 = vector.load %arg1[%c0, %c0_0] : memref<128x256xbf16, #tpu.memory_space<vmem>>, vector<128x256xbf16>
    %c0_1 = arith.constant 0 : index
    %c0_2 = arith.constant 0 : index
    %1 = vector.load %arg2[%c0_1, %c0_2] : memref<256x256xbf16, #tpu.memory_space<vmem>>, vector<256x256xbf16>
    %cst = arith.constant dense<0.000000e+00> : vector<128x256xf32>
    %2 = tpu.matmul %0, %1, %cst {dimension_numbers = #tpu.dot_dimension_numbers<[1], [0], [0], [1], [0, 0, 1, 1], [], []>} : vector<128x256xbf16>, vector<256x256xbf16>, vector<128x256xf32> -> vector<128x256xf32>
    %3 = vector.extract_strided_slice %2 {offsets = [0, 0], sizes = [128, 128], strides = [1, 1]} : vector<128x256xf32> to vector<128x128xf32>
    %4 = arith.truncf %3 : vector<128x128xf32> to vector<128x128xbf16>
    %c0_3 = arith.constant 0 : index
    %c0_4 = arith.constant 0 : index
    %5 = vector.load %arg3[%c0_3, %c0_4] : memref<128x128xbf16, #tpu.memory_space<vmem>>, vector<128x128xbf16>
    tpu.vector_store %arg3[%c0_3, %c0_4], %4 {strides = array<i32>} : memref<128x128xbf16, #tpu.memory_space<vmem>>, vector<128x128xbf16>,
    %6 = vector.extract_strided_slice %2 {offsets = [0, 128], sizes = [128, 128], strides = [1, 1]} : vector<128x256xf32> to vector<128x128xf32>
    %7 = arith.truncf %6 : vector<128x128xf32> to vector<128x128xbf16>
    %c0_5 = arith.constant 0 : index
    %c0_6 = arith.constant 0 : index
    %8 = vector.load %arg4[%c0_5, %c0_6] : memref<128x128xbf16, #tpu.memory_space<vmem>>, vector<128x128xbf16>
    tpu.vector_store %arg4[%c0_5, %c0_6], %7 {strides = array<i32>} : memref<128x128xbf16, #tpu.memory_space<vmem>>, vector<128x128xbf16>,
    return
  }
  func.func @transform_0(%arg0: i32) -> (i32, i32) {
    %c0_i32 = arith.constant 0 : i32
    %c0_i32_0 = arith.constant 0 : i32
    return %arg0, %c0_i32 : i32, i32
  }
  func.func @transform_1(%arg0: i32) -> (i32, i32) {
    %c0_i32 = arith.constant 0 : i32
    %c0_i32_0 = arith.constant 0 : i32
    %c0_i32_1 = arith.constant 0 : i32
    return %c0_i32, %c0_i32_0 : i32, i32
  }
  func.func @transform_2(%arg0: i32) -> (i32, i32) {
    %c0_i32 = arith.constant 0 : i32
    %c0_i32_0 = arith.constant 0 : i32
    return %arg0, %c0_i32 : i32, i32
  }
  func.func @transform_3(%arg0: i32) -> (i32, i32) {
    %c0_i32 = arith.constant 0 : i32
    %c0_i32_0 = arith.constant 0 : i32
    return %arg0, %c0_i32 : i32, i32
  }
}

</mosaic_0001>

<llo_original>
// kernel: self_attention_pallas.2
$region0: #{self_attention_pallas.2}
  #allocation0 [shape = 'u32[]', space=smem, size = 0x4, offset = 0x4, fixed_abs, tag = 'smem constant byte address 0x4 - core index']
  #allocation1 [shape = 'u32[72,128]{1,0:T(1,128)}', space=vmem, size = 0x9000, scoped, tag = 'internal scratch']
  %s0 = inlined_call_operand.vmem [shape: bf16[256,256], index: 0, kind: input, shape index: {}]
  %s1 = inlined_call_operand.vmem [shape: bf16[256,256], index: 1, kind: input, shape index: {}]
  %s2 = inlined_call_operand.vmem [shape: bf16[256,128], index: 2, kind: output, shape index: {0}]
  %s3 = inlined_call_operand.vmem [shape: bf16[256,128], index: 3, kind: output, shape index: {1}]
  %4 = xla_tuple %s2, %s3
  %s5 = sld [smem:[#allocation0]]
  $region49: #{self_attention_pallas.2} parent=0
    _
  %s7 = ssub.s32 1, %s5
  %s8 = scalar_select 0, %s7, %s5
  loop: start=0, step=1, limit=4
  $region2: #{self_attention_pallas.2} parent=0 // loop_pre_header
    _
  $region3: #{self_attention_pallas.2} parent=0 // loop_header
    %s10 = sphi 0, %s14
    %p11 = scmp.ge.s32.totalorder %s10, 4
    %s20 = sphi 0, %s22
    %s23 = sphi 0, %s20
    %s24 = sphi 0, %s23
    %s40 = sphi 0, %s24
    %s44 = sphi 0, %s44
    %s46 = sphi 0, %s44
    %s47 = sphi 0, %s46
    %s61 = sphi 0, %s47
    %s67 = sphi 0, %s69
    %s70 = sphi 0, %s67
    %s71 = sphi 0, %s70
    %s87 = sphi 0, %s71
    %s93 = sphi 0, %s95
    %s96 = sphi 0, %s93
    %s97 = sphi 0, %s96
    %s113 = sphi 0, %s97
  $region4: #{self_attention_pallas.2} parent=0 // loop_header_branch
    %13 = sbr.rel (%p11) target = $region8
  $region5: #{self_attention_pallas.2} parent=0 // loop_body
    %s15 = ssub.s32 %s10, 1
    %s16 = ssub.s32 %s10, 2
    %s17 = sadd.s32 %s10, 1
    %s18 = ssub.s32 %s10, %s17
    %p19 = scmp.eq.s32.totalorder %s18, 0
    %s21 = sadd.s32 %s20, 1
    %s22 = scalar_select %p19, %s20, %s21
    %p25 = pneg %p19
    %p26 = scmp.eq.s32.totalorder %s10, 1
    %p27 = por %p25, %p26
    %p28 = scmp.ne.s32.totalorder %s20, %s23
    %p29 = scmp.eq.s32.totalorder %s10, 0
    %p30 = por %p28, %p29
    %p31 = scmp.ne.s32.totalorder %s20, %s23
    %p32 = scmp.eq.s32.totalorder %s15, 1
    %p33 = por %p31, %p32
    %p34 = scmp.ne.s32.totalorder %s23, %s24
    %p35 = scmp.eq.s32.totalorder %s15, 0
    %p36 = por %p34, %p35
    %p37 = scmp.ne.s32.totalorder %s23, %s24
    %p38 = scmp.eq.s32.totalorder %s16, 1
    %p39 = por %p37, %p38
    %p41 = scmp.ne.s32.totalorder %s24, %s40
    %p42 = scmp.eq.s32.totalorder %s16, 0
    %p43 = por %p41, %p42
    %s45 = sadd.s32 %s44, 1
    %p48 = scmp.eq.s32.totalorder %s10, 1
    %p49 = scmp.ne.s32.totalorder %s44, %s46
    %p50 = scmp.eq.s32.totalorder %s10, 0
    %p51 = por %p49, %p50
    %p52 = scmp.ne.s32.totalorder %s44, %s46
    %p53 = scmp.eq.s32.totalorder %s15, 1
    %p54 = por %p52, %p53
    %p55 = scmp.ne.s32.totalorder %s46, %s47
    %p56 = scmp.eq.s32.totalorder %s15, 0
    %p57 = por %p55, %p56
    %p58 = scmp.ne.s32.totalorder %s46, %s47
    %p59 = scmp.eq.s32.totalorder %s16, 1
    %p60 = por %p58, %p59
    %p62 = scmp.ne.s32.totalorder %s47, %s61
    %p63 = scmp.eq.s32.totalorder %s16, 0
    %p64 = por %p62, %p63
    %s65 = ssub.s32 %s10, %s17
    %p66 = scmp.eq.s32.totalorder %s65, 0
    %s68 = sadd.s32 %s67, 1
    %s69 = scalar_select %p66, %s67, %s68
    %p72 = pneg %p66
    %p73 = scmp.eq.s32.totalorder %s10, 1
    %p74 = por %p72, %p73
    %p75 = scmp.ne.s32.totalorder %s67, %s70
    %p76 = scmp.eq.s32.totalorder %s10, 0
    %p77 = por %p75, %p76
    %p78 = scmp.ne.s32.totalorder %s67, %s70
    %p79 = scmp.eq.s32.totalorder %s15, 1
    %p80 = por %p78, %p79
    %p81 = scmp.ne.s32.totalorder %s70, %s71
    %p82 = scmp.eq.s32.totalorder %s15, 0
    %p83 = por %p81, %p82
    %p84 = scmp.ne.s32.totalorder %s70, %s71
    %p85 = scmp.eq.s32.totalorder %s16, 1
    %p86 = por %p84, %p85
    %p88 = scmp.ne.s32.totalorder %s71, %s87
    %p89 = scmp.eq.s32.totalorder %s16, 0
    %p90 = por %p88, %p89
    %s91 = ssub.s32 %s10, %s17
    %p92 = scmp.eq.s32.totalorder %s91, 0
    %s94 = sadd.s32 %s93, 1
    %s95 = scalar_select %p92, %s93, %s94
    %p98 = pneg %p92
    %p99 = scmp.eq.s32.totalorder %s10, 1
    %p100 = por %p98, %p99
    %p101 = scmp.ne.s32.totalorder %s93, %s96
    %p102 = scmp.eq.s32.totalorder %s10, 0
    %p103 = por %p101, %p102
    %p104 = scmp.ne.s32.totalorder %s93, %s96
    %p105 = scmp.eq.s32.totalorder %s15, 1
    %p106 = por %p104, %p105
    %p107 = scmp.ne.s32.totalorder %s96, %s97
    %p108 = scmp.eq.s32.totalorder %s15, 0
    %p109 = por %p107, %p108
    %p110 = scmp.ne.s32.totalorder %s96, %s97
    %p111 = scmp.eq.s32.totalorder %s16, 1
    %p112 = por %p110, %p111
    %p114 = scmp.ne.s32.totalorder %s97, %s113
    %p115 = scmp.eq.s32.totalorder %s16, 0
    %p116 = por %p114, %p115
    %p117 = scmp.le.s32.totalorder 1, %s10
    %p118 = scmp.lt.s32.totalorder %s10, 3
    %p119 = pnand %p117, %p118
    %p120 = pneg %p119
    // Predicated region
    $region9: #{self_attention_pallas.2} parent=5 // pred_check
      _
    $region10: #{self_attention_pallas.2} parent=5 // pred_check_branch
      %122 = sbr.rel (%p119) target = $region12
    $region11: #{self_attention_pallas.2} parent=5 // pred_region
      %s123 = ssub.s32 %s10, 1
      // Predicated region
      $region13: #{self_attention_pallas.2} parent=11 // pred_check
        %p124 = pneg %p57
      $region14: #{self_attention_pallas.2} parent=11 // pred_check_branch
        %126 = sbr.rel (%p124) target = $region16
      $region15: #{self_attention_pallas.2} parent=11 // pred_region
        _
      $region16: #{self_attention_pallas.2} parent=11 // pred_fallthru
        _
    $region12: #{self_attention_pallas.2} parent=5 // pred_fallthru
      _
    %p127 = scmp.lt.s32.totalorder %s10, 2
    // Predicated region
    $region17: #{self_attention_pallas.2} parent=5 // pred_check
      %p128 = pneg %p127
    $region18: #{self_attention_pallas.2} parent=5 // pred_check_branch
      %130 = sbr.rel (%p128) target = $region20
    $region19: #{self_attention_pallas.2} parent=5 // pred_region
      // Predicated region
      $region21: #{self_attention_pallas.2} parent=19 // pred_check
        %p131 = pneg %p30
      $region22: #{self_attention_pallas.2} parent=19 // pred_check_branch
        %133 = sbr.rel (%p131) target = $region24
      $region23: #{self_attention_pallas.2} parent=19 // pred_region
        %s134 = smul.u32 16, %s10
        %p135 = scmp.lt.s32.totalorder %s134, 31
        %s136 = scalar_select %p135, %s134, 31
        %s137 = smul.addr %s136, 2
        %s138 = smul.addr %s137, 4
        %s139 = scalar_lea.vmem %s0, %s138
        %s140 = smul.u32 16, %s10
      $region24: #{self_attention_pallas.2} parent=19 // pred_fallthru
        _
    $region20: #{self_attention_pallas.2} parent=5 // pred_fallthru
      _
    %p141 = scmp.le.s32.totalorder 1, %s10
    %p142 = scmp.lt.s32.totalorder %s10, 3
    %p143 = pnand %p141, %p142
    %p144 = pneg %p143
    // Predicated region
    $region25: #{self_attention_pallas.2} parent=5 // pred_check
      _
    $region26: #{self_attention_pallas.2} parent=5 // pred_check_branch
      %146 = sbr.rel (%p143) target = $region28
    $region27: #{self_attention_pallas.2} parent=5 // pred_region
      %s147 = ssub.s32 %s10, 1
      %s148 = smul.u32 16, %s15
      %p149 = scmp.lt.s32.totalorder %s148, 31
      %s150 = scalar_select %p149, %s148, 31
      %s151 = smul.addr %s150, 2
      %s152 = smul.addr %s151, 4
      %s153 = scalar_lea.vmem %s0, %s152
      %p154 = pneg %p36
      %p155 = pneg %p33
      %p156 = pneg %p57
      %p157 = pneg %p54
      %p158 = pneg %p83
      %p159 = pneg %p80
      %s160 = smul.u32 16, %s15
      %p161 = scmp.lt.s32.totalorder %s160, 31
      %s162 = scalar_select %p161, %s160, 31
      %s163 = smul.addr %s162, 4
      %s164 = scalar_lea.vmem %s2, %s163
      %p165 = pneg %p109
      %p166 = pneg %p106
      %s167 = smul.u32 16, %s15
      %p168 = scmp.lt.s32.totalorder %s167, 31
      %s169 = scalar_select %p168, %s167, 31
      %s170 = smul.addr %s169, 4
      %s171 = scalar_lea.vmem %s3, %s170
      %s172 = smul.u32 16, %s15
      %p173 = scmp.lt.s32.totalorder %s172, 31
      %s174 = scalar_select %p173, %s172, 31
      %s175 = smul.addr %s174, 2
      %s176 = smul.addr %s175, 4
      %s177 = scalar_lea.vmem %s0, %s176
      %s178 = smul.u32 16, %s15
      %s179 = smul.u32 16, %s15
      %p180 = scmp.lt.s32.totalorder %s179, 31
      %s181 = scalar_select %p180, %s179, 31
      %s182 = smul.addr %s181, 4
      %s183 = scalar_lea.vmem %s2, %s182
      %s184 = smul.u32 16, %s15
      %s185 = smul.u32 16, %s15
      %p186 = scmp.lt.s32.totalorder %s185, 31
      %s187 = scalar_select %p186, %s185, 31
      %s188 = smul.addr %s187, 4
      %s189 = scalar_lea.vmem %s3, %s188
      %s190 = smul.u32 16, %s15
      %v191 = vld [vmem:[%s177] sm:$0xff]
      %v192 = vld [vmem:[%s177 + $0x8] sm:$0xff]
      %v193 = vld [vmem:[%s177 + $0x10] sm:$0xff]
      %v194 = vld [vmem:[%s177 + $0x18] sm:$0xff]
      %v195 = vld [vmem:[%s177 + $0x20] sm:$0xff]
      %v196 = vld [vmem:[%s177 + $0x28] sm:$0xff]
      %v197 = vld [vmem:[%s177 + $0x30] sm:$0xff]
      %v198 = vld [vmem:[%s177 + $0x38] sm:$0xff]
      %v199 = vld [vmem:[%s177 + $0x40] sm:$0xff]
      %v200 = vld [vmem:[%s177 + $0x48] sm:$0xff]
      %v201 = vld [vmem:[%s177 + $0x50] sm:$0xff]
      %v202 = vld [vmem:[%s177 + $0x58] sm:$0xff]
      %v203 = vld [vmem:[%s177 + $0x60] sm:$0xff]
      %v204 = vld [vmem:[%s177 + $0x68] sm:$0xff]
      %v205 = vld [vmem:[%s177 + $0x70] sm:$0xff]
      %v206 = vld [vmem:[%s177 + $0x78] sm:$0xff]
      %v207 = vld [vmem:[%s1] sm:$0xff]
      %v208 = vld [vmem:[%s1 + $0x8] sm:$0xff]
      %v209 = vld [vmem:[%s1 + $0x10] sm:$0xff]
      %v210 = vld [vmem:[%s1 + $0x18] sm:$0xff]
      %v211 = vld [vmem:[%s1 + $0x20] sm:$0xff]
      %v212 = vld [vmem:[%s1 + $0x28] sm:$0xff]
      %v213 = vld [vmem:[%s1 + $0x30] sm:$0xff]
      %v214 = vld [vmem:[%s1 + $0x38] sm:$0xff]
      %v215 = vld [vmem:[%s1 + $0x40] sm:$0xff]
      %v216 = vld [vmem:[%s1 + $0x48] sm:$0xff]
      %v217 = vld [vmem:[%s1 + $0x50] sm:$0xff]
      %v218 = vld [vmem:[%s1 + $0x58] sm:$0xff]
      %v219 = vld [vmem:[%s1 + $0x60] sm:$0xff]
      %v220 = vld [vmem:[%s1 + $0x68] sm:$0xff]
      %v221 = vld [vmem:[%s1 + $0x70] sm:$0xff]
      %v222 = vld [vmem:[%s1 + $0x78] sm:$0xff]
      %v223 = vld [vmem:[%s1 + $0x80] sm:$0xff]
      %v224 = vld [vmem:[%s1 + $0x88] sm:$0xff]
      %v225 = vld [vmem:[%s1 + $0x90] sm:$0xff]
      %v226 = vld [vmem:[%s1 + $0x98] sm:$0xff]
      %v227 = vld [vmem:[%s1 + $0xa0] sm:$0xff]
      %v228 = vld [vmem:[%s1 + $0xa8] sm:$0xff]
      %v229 = vld [vmem:[%s1 + $0xb0] sm:$0xff]
      %v230 = vld [vmem:[%s1 + $0xb8] sm:$0xff]
      %v231 = vld [vmem:[%s1 + $0xc0] sm:$0xff]
      %v232 = vld [vmem:[%s1 + $0xc8] sm:$0xff]
      %v233 = vld [vmem:[%s1 + $0xd0] sm:$0xff]
      %v234 = vld [vmem:[%s1 + $0xd8] sm:$0xff]
      %v235 = vld [vmem:[%s1 + $0xe0] sm:$0xff]
      %v236 = vld [vmem:[%s1 + $0xe8] sm:$0xff]
      %v237 = vld [vmem:[%s1 + $0xf0] sm:$0xff]
      %v238 = vld [vmem:[%s1 + $0xf8] sm:$0xff]
      %v255 = vunpack.c.l.b16 %v191
      %v256 = vunpack.c.h.b16 %v191
      %v257 = vunpack.c.l.b16 %v192
      %v258 = vunpack.c.h.b16 %v192
      %v259 = vunpack.c.l.b16 %v193
      %v260 = vunpack.c.h.b16 %v193
      %v261 = vunpack.c.l.b16 %v194
      %v262 = vunpack.c.h.b16 %v194
      %v263 = vunpack.c.l.b16 %v195
      %v264 = vunpack.c.h.b16 %v195
      %v265 = vunpack.c.l.b16 %v196
      %v266 = vunpack.c.h.b16 %v196
      %v267 = vunpack.c.l.b16 %v197
      %v268 = vunpack.c.h.b16 %v197
      %v269 = vunpack.c.l.b16 %v198
      %v270 = vunpack.c.h.b16 %v198
      %v271 = vunpack.c.l.b16 %v199
      %v272 = vunpack.c.h.b16 %v199
      %v273 = vunpack.c.l.b16 %v200
      %v274 = vunpack.c.h.b16 %v200
      %v275 = vunpack.c.l.b16 %v201
      %v276 = vunpack.c.h.b16 %v201
      %v277 = vunpack.c.l.b16 %v202
      %v278 = vunpack.c.h.b16 %v202
      %v279 = vunpack.c.l.b16 %v203
      %v280 = vunpack.c.h.b16 %v203
      %v281 = vunpack.c.l.b16 %v204
      %v282 = vunpack.c.h.b16 %v204
      %v283 = vunpack.c.l.b16 %v205
      %v284 = vunpack.c.h.b16 %v205
      %v285 = vunpack.c.l.b16 %v206
      %v286 = vunpack.c.h.b16 %v206
      %v287 = vpack.c.b16 %v257, %v255
      %v288 = vpack.c.b16 %v258, %v256
      %v289 = vpack.c.b16 %v261, %v259
      %v290 = vpack.c.b16 %v262, %v260
      %v291 = vpack.c.b16 %v265, %v263
      %v292 = vpack.c.b16 %v266, %v264
      %v293 = vpack.c.b16 %v269, %v267
      %v294 = vpack.c.b16 %v270, %v268
      %v295 = vpack.c.b16 %v273, %v271
      %v296 = vpack.c.b16 %v274, %v272
      %v297 = vpack.c.b16 %v277, %v275
      %v298 = vpack.c.b16 %v278, %v276
      %v299 = vpack.c.b16 %v281, %v279
      %v300 = vpack.c.b16 %v282, %v280
      %v301 = vpack.c.b16 %v285, %v283
      %v302 = vpack.c.b16 %v286, %v284
      %v351 = vunpack.c.l.b16 %v207
      %v352 = vunpack.c.h.b16 %v207
      %v353 = vunpack.c.l.b16 %v208
      %v354 = vunpack.c.h.b16 %v208
      %v355 = vunpack.c.l.b16 %v209
      %v356 = vunpack.c.h.b16 %v209
      %v357 = vunpack.c.l.b16 %v210
      %v358 = vunpack.c.h.b16 %v210
      %v359 = vunpack.c.l.b16 %v211
      %v360 = vunpack.c.h.b16 %v211
      %v361 = vunpack.c.l.b16 %v212
      %v362 = vunpack.c.h.b16 %v212
      %v363 = vunpack.c.l.b16 %v213
      %v364 = vunpack.c.h.b16 %v213
      %v365 = vunpack.c.l.b16 %v214
      %v366 = vunpack.c.h.b16 %v214
      %v367 = vunpack.c.l.b16 %v215
      %v368 = vunpack.c.h.b16 %v215
      %v369 = vunpack.c.l.b16 %v216
      %v370 = vunpack.c.h.b16 %v216
      %v371 = vunpack.c.l.b16 %v217
      %v372 = vunpack.c.h.b16 %v217
      %v373 = vunpack.c.l.b16 %v218
      %v374 = vunpack.c.h.b16 %v218
      %v375 = vunpack.c.l.b16 %v219
      %v376 = vunpack.c.h.b16 %v219
      %v377 = vunpack.c.l.b16 %v220
      %v378 = vunpack.c.h.b16 %v220
      %v379 = vunpack.c.l.b16 %v221
      %v380 = vunpack.c.h.b16 %v221
      %v381 = vunpack.c.l.b16 %v222
      %v382 = vunpack.c.h.b16 %v222
      %v383 = vunpack.c.l.b16 %v223
      %v384 = vunpack.c.h.b16 %v223
      %v385 = vunpack.c.l.b16 %v224
      %v386 = vunpack.c.h.b16 %v224
      %v387 = vunpack.c.l.b16 %v225
      %v388 = vunpack.c.h.b16 %v225
      %v389 = vunpack.c.l.b16 %v226
      %v390 = vunpack.c.h.b16 %v226
      %v391 = vunpack.c.l.b16 %v227
      %v392 = vunpack.c.h.b16 %v227
      %v393 = vunpack.c.l.b16 %v228
      %v394 = vunpack.c.h.b16 %v228
      %v395 = vunpack.c.l.b16 %v229
      %v396 = vunpack.c.h.b16 %v229
      %v397 = vunpack.c.l.b16 %v230
      %v398 = vunpack.c.h.b16 %v230
      %v399 = vunpack.c.l.b16 %v231
      %v400 = vunpack.c.h.b16 %v231
      %v401 = vunpack.c.l.b16 %v232
      %v402 = vunpack.c.h.b16 %v232
      %v403 = vunpack.c.l.b16 %v233
      %v404 = vunpack.c.h.b16 %v233
      %v405 = vunpack.c.l.b16 %v234
      %v406 = vunpack.c.h.b16 %v234
      %v407 = vunpack.c.l.b16 %v235
      %v408 = vunpack.c.h.b16 %v235
      %v409 = vunpack.c.l.b16 %v236
      %v410 = vunpack.c.h.b16 %v236
      %v411 = vunpack.c.l.b16 %v237
      %v412 = vunpack.c.h.b16 %v237
      %v413 = vunpack.c.l.b16 %v238
      %v414 = vunpack.c.h.b16 %v238
      %v415 = vpack.c.b16 %v353, %v351
      %v416 = vpack.c.b16 %v354, %v352
      %v417 = vpack.c.b16 %v357, %v355
      %v418 = vpack.c.b16 %v358, %v356
      %v419 = vpack.c.b16 %v361, %v359
      %v420 = vpack.c.b16 %v362, %v360
      %v421 = vpack.c.b16 %v365, %v363
      %v422 = vpack.c.b16 %v366, %v364
      %v423 = vpack.c.b16 %v369, %v367
      %v424 = vpack.c.b16 %v370, %v368
      %v425 = vpack.c.b16 %v373, %v371
      %v426 = vpack.c.b16 %v374, %v372
      %v427 = vpack.c.b16 %v377, %v375
      %v428 = vpack.c.b16 %v378, %v376
      %v429 = vpack.c.b16 %v381, %v379
      %v430 = vpack.c.b16 %v382, %v380
      %v431 = vpack.c.b16 %v385, %v383
      %v432 = vpack.c.b16 %v386, %v384
      %v433 = vpack.c.b16 %v389, %v387
      %v434 = vpack.c.b16 %v390, %v388
      %v435 = vpack.c.b16 %v393, %v391
      %v436 = vpack.c.b16 %v394, %v392
      %v437 = vpack.c.b16 %v397, %v395
      %v438 = vpack.c.b16 %v398, %v396
      %v439 = vpack.c.b16 %v401, %v399
      %v440 = vpack.c.b16 %v402, %v400
      %v441 = vpack.c.b16 %v405, %v403
      %v442 = vpack.c.b16 %v406, %v404
      %v443 = vpack.c.b16 %v409, %v407
      %v444 = vpack.c.b16 %v410, %v408
      %v445 = vpack.c.b16 %v413, %v411
      %v446 = vpack.c.b16 %v414, %v412
      %479 = vmatpush.bf16.msra.mxu0 %v429
      %480 = vmatpush.bf16.msra.mxu0 %v427
      %481 = vmatpush.bf16.msra.mxu0 %v425
      %482 = vmatpush.bf16.msra.mxu0 %v423
      %483 = vmatpush.bf16.msra.mxu0 %v421
      %484 = vmatpush.bf16.msra.mxu0 %v419
      %485 = vmatpush.bf16.msra.mxu0 %v417
      %486 = vmatpush.bf16.msra.mxu0 %v415
      %487 = vmatmul.bf16.gmra.mxu0 %v287
      %v488 = vpop.f32.mrf.mxu0
      %v489 = vadd.f32 0.0, %v488
      %v490 = vpop.f32.mrf.mxu0
      %v491 = vadd.f32 0.0, %v490
      %492 = vmatmul.bf16.gmra.mxu0 %v289
      %v493 = vpop.f32.mrf.mxu0
      %v494 = vadd.f32 0.0, %v493
      %v495 = vpop.f32.mrf.mxu0
      %v496 = vadd.f32 0.0, %v495
      %497 = vmatmul.bf16.gmra.mxu0 %v291
      %v498 = vpop.f32.mrf.mxu0
      %v499 = vadd.f32 0.0, %v498
      %v500 = vpop.f32.mrf.mxu0
      %v501 = vadd.f32 0.0, %v500
      %502 = vmatmul.bf16.gmra.mxu0 %v293
      %v503 = vpop.f32.mrf.mxu0
      %v504 = vadd.f32 0.0, %v503
      %v505 = vpop.f32.mrf.mxu0
      %v506 = vadd.f32 0.0, %v505
      %507 = vmatmul.bf16.gmra.mxu0 %v295
      %v508 = vpop.f32.mrf.mxu0
      %v509 = vadd.f32 0.0, %v508
      %v510 = vpop.f32.mrf.mxu0
      %v511 = vadd.f32 0.0, %v510
      %512 = vmatmul.bf16.gmra.mxu0 %v297
      %v513 = vpop.f32.mrf.mxu0
      %v514 = vadd.f32 0.0, %v513
      %v515 = vpop.f32.mrf.mxu0
      %v516 = vadd.f32 0.0, %v515
      %517 = vmatmul.bf16.gmra.mxu0 %v299
      %v518 = vpop.f32.mrf.mxu0
      %v519 = vadd.f32 0.0, %v518
      %v520 = vpop.f32.mrf.mxu0
      %v521 = vadd.f32 0.0, %v520
      %522 = vmatmul.bf16.gmra.mxu0 %v301
      %v523 = vpop.f32.mrf.mxu0
      %v524 = vadd.f32 0.0, %v523
      %v525 = vpop.f32.mrf.mxu0
      %v526 = vadd.f32 0.0, %v525
      %527 = vdwg.mxu0
      %528 = vmatpush.bf16.msra.mxu0 %v445
      %529 = vmatpush.bf16.msra.mxu0 %v443
      %530 = vmatpush.bf16.msra.mxu0 %v441
      %531 = vmatpush.bf16.msra.mxu0 %v439
      %532 = vmatpush.bf16.msra.mxu0 %v437
      %533 = vmatpush.bf16.msra.mxu0 %v435
      %534 = vmatpush.bf16.msra.mxu0 %v433
      %535 = vmatpush.bf16.msra.mxu0 %v431
      %536 = vmatmul.bf16.gmra.mxu0 %v288
      %v537 = vpop.f32.mrf.mxu0
      %v538 = vadd.f32 %v489, %v537
      %v539 = vpop.f32.mrf.mxu0
      %v540 = vadd.f32 %v491, %v539
      %541 = vmatmul.bf16.gmra.mxu0 %v290
      %v542 = vpop.f32.mrf.mxu0
      %v543 = vadd.f32 %v494, %v542
      %v544 = vpop.f32.mrf.mxu0
      %v545 = vadd.f32 %v496, %v544
      %546 = vmatmul.bf16.gmra.mxu0 %v292
      %v547 = vpop.f32.mrf.mxu0
      %v548 = vadd.f32 %v499, %v547
      %v549 = vpop.f32.mrf.mxu0
      %v550 = vadd.f32 %v501, %v549
      %551 = vmatmul.bf16.gmra.mxu0 %v294
      %v552 = vpop.f32.mrf.mxu0
      %v553 = vadd.f32 %v504, %v552
      %v554 = vpop.f32.mrf.mxu0
      %v555 = vadd.f32 %v506, %v554
      %556 = vmatmul.bf16.gmra.mxu0 %v296
      %v557 = vpop.f32.mrf.mxu0
      %v558 = vadd.f32 %v509, %v557
      %v559 = vpop.f32.mrf.mxu0
      %v560 = vadd.f32 %v511, %v559
      %561 = vmatmul.bf16.gmra.mxu0 %v298
      %v562 = vpop.f32.mrf.mxu0
      %v563 = vadd.f32 %v514, %v562
      %v564 = vpop.f32.mrf.mxu0
      %v565 = vadd.f32 %v516, %v564
      %566 = vmatmul.bf16.gmra.mxu0 %v300
      %v567 = vpop.f32.mrf.mxu0
      %v568 = vadd.f32 %v519, %v567
      %v569 = vpop.f32.mrf.mxu0
      %v570 = vadd.f32 %v521, %v569
      %571 = vmatmul.bf16.gmra.mxu0 %v302
      %v572 = vpop.f32.mrf.mxu0
      %v573 = vadd.f32 %v524, %v572
      %v574 = vpop.f32.mrf.mxu0
      %v575 = vadd.f32 %v526, %v574
      %576 = vdwg.mxu0
      %577 = vmatpush.bf16.msra.mxu0 %v430
      %578 = vmatpush.bf16.msra.mxu0 %v428
      %579 = vmatpush.bf16.msra.mxu0 %v426
      %580 = vmatpush.bf16.msra.mxu0 %v424
      %581 = vmatpush.bf16.msra.mxu0 %v422
      %582 = vmatpush.bf16.msra.mxu0 %v420
      %583 = vmatpush.bf16.msra.mxu0 %v418
      %584 = vmatpush.bf16.msra.mxu0 %v416
      %585 = vmatmul.bf16.gmra.mxu0 %v287
      %v586 = vpop.f32.mrf.mxu0
      %v587 = vadd.f32 0.0, %v586
      %v588 = vpop.f32.mrf.mxu0
      %v589 = vadd.f32 0.0, %v588
      %590 = vmatmul.bf16.gmra.mxu0 %v289
      %v591 = vpop.f32.mrf.mxu0
      %v592 = vadd.f32 0.0, %v591
      %v593 = vpop.f32.mrf.mxu0
      %v594 = vadd.f32 0.0, %v593
      %595 = vmatmul.bf16.gmra.mxu0 %v291
      %v596 = vpop.f32.mrf.mxu0
      %v597 = vadd.f32 0.0, %v596
      %v598 = vpop.f32.mrf.mxu0
      %v599 = vadd.f32 0.0, %v598
      %600 = vmatmul.bf16.gmra.mxu0 %v293
      %v601 = vpop.f32.mrf.mxu0
      %v602 = vadd.f32 0.0, %v601
      %v603 = vpop.f32.mrf.mxu0
      %v604 = vadd.f32 0.0, %v603
      %605 = vmatmul.bf16.gmra.mxu0 %v295
      %v606 = vpop.f32.mrf.mxu0
      %v607 = vadd.f32 0.0, %v606
      %v608 = vpop.f32.mrf.mxu0
      %v609 = vadd.f32 0.0, %v608
      %610 = vmatmul.bf16.gmra.mxu0 %v297
      %v611 = vpop.f32.mrf.mxu0
      %v612 = vadd.f32 0.0, %v611
      %v613 = vpop.f32.mrf.mxu0
      %v614 = vadd.f32 0.0, %v613
      %615 = vmatmul.bf16.gmra.mxu0 %v299
      %v616 = vpop.f32.mrf.mxu0
      %v617 = vadd.f32 0.0, %v616
      %v618 = vpop.f32.mrf.mxu0
      %v619 = vadd.f32 0.0, %v618
      %620 = vmatmul.bf16.gmra.mxu0 %v301
      %v621 = vpop.f32.mrf.mxu0
      %v622 = vadd.f32 0.0, %v621
      %v623 = vpop.f32.mrf.mxu0
      %v624 = vadd.f32 0.0, %v623
      %625 = vdwg.mxu0
      %626 = vmatpush.bf16.msra.mxu0 %v446
      %627 = vmatpush.bf16.msra.mxu0 %v444
      %628 = vmatpush.bf16.msra.mxu0 %v442
      %629 = vmatpush.bf16.msra.mxu0 %v440
      %630 = vmatpush.bf16.msra.mxu0 %v438
      %631 = vmatpush.bf16.msra.mxu0 %v436
      %632 = vmatpush.bf16.msra.mxu0 %v434
      %633 = vmatpush.bf16.msra.mxu0 %v432
      %634 = vmatmul.bf16.gmra.mxu0 %v288
      %v635 = vpop.f32.mrf.mxu0
      %v636 = vadd.f32 %v587, %v635
      %v637 = vpop.f32.mrf.mxu0
      %v638 = vadd.f32 %v589, %v637
      %639 = vmatmul.bf16.gmra.mxu0 %v290
      %v640 = vpop.f32.mrf.mxu0
      %v641 = vadd.f32 %v592, %v640
      %v642 = vpop.f32.mrf.mxu0
      %v643 = vadd.f32 %v594, %v642
      %644 = vmatmul.bf16.gmra.mxu0 %v292
      %v645 = vpop.f32.mrf.mxu0
      %v646 = vadd.f32 %v597, %v645
      %v647 = vpop.f32.mrf.mxu0
      %v648 = vadd.f32 %v599, %v647
      %649 = vmatmul.bf16.gmra.mxu0 %v294
      %v650 = vpop.f32.mrf.mxu0
      %v651 = vadd.f32 %v602, %v650
      %v652 = vpop.f32.mrf.mxu0
      %v653 = vadd.f32 %v604, %v652
      %654 = vmatmul.bf16.gmra.mxu0 %v296
      %v655 = vpop.f32.mrf.mxu0
      %v656 = vadd.f32 %v607, %v655
      %v657 = vpop.f32.mrf.mxu0
      %v658 = vadd.f32 %v609, %v657
      %659 = vmatmul.bf16.gmra.mxu0 %v298
      %v660 = vpop.f32.mrf.mxu0
      %v661 = vadd.f32 %v612, %v660
      %v662 = vpop.f32.mrf.mxu0
      %v663 = vadd.f32 %v614, %v662
      %664 = vmatmul.bf16.gmra.mxu0 %v300
      %v665 = vpop.f32.mrf.mxu0
      %v666 = vadd.f32 %v617, %v665
      %v667 = vpop.f32.mrf.mxu0
      %v668 = vadd.f32 %v619, %v667
      %669 = vmatmul.bf16.gmra.mxu0 %v302
      %v670 = vpop.f32.mrf.mxu0
      %v671 = vadd.f32 %v622, %v670
      %v672 = vpop.f32.mrf.mxu0
      %v673 = vadd.f32 %v624, %v672
      %674 = vdwg.mxu0
      %v675 = vpack.c.bf16 %v538, %v538
      %v676 = vpack.c.bf16 %v540, %v540
      %v677 = vpack.c.bf16 %v543, %v543
      %v678 = vpack.c.bf16 %v545, %v545
      %v679 = vpack.c.bf16 %v548, %v548
      %v680 = vpack.c.bf16 %v550, %v550
      %v681 = vpack.c.bf16 %v553, %v553
      %v682 = vpack.c.bf16 %v555, %v555
      %v683 = vpack.c.bf16 %v558, %v558
      %v684 = vpack.c.bf16 %v560, %v560
      %v685 = vpack.c.bf16 %v563, %v563
      %v686 = vpack.c.bf16 %v565, %v565
      %v687 = vpack.c.bf16 %v568, %v568
      %v688 = vpack.c.bf16 %v570, %v570
      %v689 = vpack.c.bf16 %v573, %v573
      %v690 = vpack.c.bf16 %v575, %v575
      %691 = vst [vmem:[%s183] sm:$0xf] %v675
      %692 = vst [vmem:[%s183 + $0x4] sm:$0xf] %v676
      %693 = vst [vmem:[%s183 + $0x8] sm:$0xf] %v677
      %694 = vst [vmem:[%s183 + $0xc] sm:$0xf] %v678
      %695 = vst [vmem:[%s183 + $0x10] sm:$0xf] %v679
      %696 = vst [vmem:[%s183 + $0x14] sm:$0xf] %v680
      %697 = vst [vmem:[%s183 + $0x18] sm:$0xf] %v681
      %698 = vst [vmem:[%s183 + $0x1c] sm:$0xf] %v682
      %699 = vst [vmem:[%s183 + $0x20] sm:$0xf] %v683
      %700 = vst [vmem:[%s183 + $0x24] sm:$0xf] %v684
      %701 = vst [vmem:[%s183 + $0x28] sm:$0xf] %v685
      %702 = vst [vmem:[%s183 + $0x2c] sm:$0xf] %v686
      %703 = vst [vmem:[%s183 + $0x30] sm:$0xf] %v687
      %704 = vst [vmem:[%s183 + $0x34] sm:$0xf] %v688
      %705 = vst [vmem:[%s183 + $0x38] sm:$0xf] %v689
      %706 = vst [vmem:[%s183 + $0x3c] sm:$0xf] %v690
      %v707 = vpack.c.bf16 %v636, %v636
      %v708 = vpack.c.bf16 %v638, %v638
      %v709 = vpack.c.bf16 %v641, %v641
      %v710 = vpack.c.bf16 %v643, %v643
      %v711 = vpack.c.bf16 %v646, %v646
      %v712 = vpack.c.bf16 %v648, %v648
      %v713 = vpack.c.bf16 %v651, %v651
      %v714 = vpack.c.bf16 %v653, %v653
      %v715 = vpack.c.bf16 %v656, %v656
      %v716 = vpack.c.bf16 %v658, %v658
      %v717 = vpack.c.bf16 %v661, %v661
      %v718 = vpack.c.bf16 %v663, %v663
      %v719 = vpack.c.bf16 %v666, %v666
      %v720 = vpack.c.bf16 %v668, %v668
      %v721 = vpack.c.bf16 %v671, %v671
      %v722 = vpack.c.bf16 %v673, %v673
      %723 = vst [vmem:[%s189] sm:$0xf] %v707
      %724 = vst [vmem:[%s189 + $0x4] sm:$0xf] %v708
      %725 = vst [vmem:[%s189 + $0x8] sm:$0xf] %v709
      %726 = vst [vmem:[%s189 + $0xc] sm:$0xf] %v710
      %727 = vst [vmem:[%s189 + $0x10] sm:$0xf] %v711
      %728 = vst [vmem:[%s189 + $0x14] sm:$0xf] %v712
      %729 = vst [vmem:[%s189 + $0x18] sm:$0xf] %v713
      %730 = vst [vmem:[%s189 + $0x1c] sm:$0xf] %v714
      %731 = vst [vmem:[%s189 + $0x20] sm:$0xf] %v715
      %732 = vst [vmem:[%s189 + $0x24] sm:$0xf] %v716
      %733 = vst [vmem:[%s189 + $0x28] sm:$0xf] %v717
      %734 = vst [vmem:[%s189 + $0x2c] sm:$0xf] %v718
      %735 = vst [vmem:[%s189 + $0x30] sm:$0xf] %v719
      %736 = vst [vmem:[%s189 + $0x34] sm:$0xf] %v720
      %737 = vst [vmem:[%s189 + $0x38] sm:$0xf] %v721
      %738 = vst [vmem:[%s189 + $0x3c] sm:$0xf] %v722
      %s739 = smul.u32 16, %s15
      %p740 = scmp.lt.s32.totalorder %s739, 31
      %s741 = scalar_select %p740, %s739, 31
      %s742 = smul.addr %s741, 4
      %s743 = scalar_lea.vmem %s2, %s742
      %s744 = smul.u32 16, %s15
      %p745 = scmp.lt.s32.totalorder %s744, 31
      %s746 = scalar_select %p745, %s744, 31
      %s747 = smul.addr %s746, 4
      %s748 = scalar_lea.vmem %s3, %s747
      // Predicated region
      $region29: #{self_attention_pallas.2} parent=27 // pred_check
        %p749 = pneg %p80
      $region30: #{self_attention_pallas.2} parent=27 // pred_check_branch
        %751 = sbr.rel (%p749) target = $region32
      $region31: #{self_attention_pallas.2} parent=27 // pred_region
        %s752 = smul.u32 16, %s15
      $region32: #{self_attention_pallas.2} parent=27 // pred_fallthru
        _
      // Predicated region
      $region33: #{self_attention_pallas.2} parent=27 // pred_check
        %p753 = pneg %p106
      $region34: #{self_attention_pallas.2} parent=27 // pred_check_branch
        %755 = sbr.rel (%p753) target = $region36
      $region35: #{self_attention_pallas.2} parent=27 // pred_region
        %s756 = smul.u32 16, %s15
      $region36: #{self_attention_pallas.2} parent=27 // pred_fallthru
        _
    $region28: #{self_attention_pallas.2} parent=5 // pred_fallthru
      _
    %p757 = scmp.le.s32.totalorder 2, %s10
    // Predicated region
    $region37: #{self_attention_pallas.2} parent=5 // pred_check
      %p758 = pneg %p757
    $region38: #{self_attention_pallas.2} parent=5 // pred_check_branch
      %760 = sbr.rel (%p758) target = $region40
    $region39: #{self_attention_pallas.2} parent=5 // pred_region
      %s761 = ssub.s32 %s10, 2
      // Predicated region
      $region41: #{self_attention_pallas.2} parent=39 // pred_check
        %p762 = pneg %p86
      $region42: #{self_attention_pallas.2} parent=39 // pred_check_branch
        %764 = sbr.rel (%p762) target = $region44
      $region43: #{self_attention_pallas.2} parent=39 // pred_region
        %s765 = smul.u32 16, %s16
        %p766 = scmp.lt.s32.totalorder %s765, 31
        %s767 = scalar_select %p766, %s765, 31
        %s768 = smul.addr %s767, 4
        %s769 = scalar_lea.vmem %s2, %s768
      $region44: #{self_attention_pallas.2} parent=39 // pred_fallthru
        _
      // Predicated region
      $region45: #{self_attention_pallas.2} parent=39 // pred_check
        %p770 = pneg %p112
      $region46: #{self_attention_pallas.2} parent=39 // pred_check_branch
        %772 = sbr.rel (%p770) target = $region48
      $region47: #{self_attention_pallas.2} parent=39 // pred_region
        %s773 = smul.u32 16, %s16
        %p774 = scmp.lt.s32.totalorder %s773, 31
        %s775 = scalar_select %p774, %s773, 31
        %s776 = smul.addr %s775, 4
        %s777 = scalar_lea.vmem %s3, %s776
      $region48: #{self_attention_pallas.2} parent=39 // pred_fallthru
        _
    $region40: #{self_attention_pallas.2} parent=5 // pred_fallthru
      _
  $region6: #{self_attention_pallas.2} parent=0 // loop_footer
    %s14 = sadd.s32 1, %s10
  $region7: #{self_attention_pallas.2} parent=0 // loop_footer_branch
    %9 = sbr.rel target = $region3
  $region8: #{self_attention_pallas.2} parent=0 // loop_exit
    _

// kernel: self_attention_pallas.3
$region0: #{self_attention_pallas.3}
  #allocation0 [shape = 'u32[]', space=smem, size = 0x4, offset = 0x4, fixed_abs, tag = 'smem constant byte address 0x4 - core index']
  #allocation1 [shape = 'u32[72,128]{1,0:T(1,128)}', space=vmem, size = 0x9000, scoped, tag = 'internal scratch']
  %s0 = inlined_call_operand.vmem [shape: bf16[256,256], index: 0, kind: input, shape index: {}]
  %s1 = inlined_call_operand.vmem [shape: bf16[256,128], index: 1, kind: input, shape index: {}]
  %s2 = inlined_call_operand.vmem [shape: bf16[256,128], index: 2, kind: input, shape index: {}]
  %s3 = inlined_call_operand.vmem [shape: bf16[256,128], index: 3, kind: input, shape index: {}]
  %s4 = inlined_call_operand.vmem [shape: bf16[128,256], index: 4, kind: input, shape index: {}]
  %s5 = inlined_call_operand.hbm [shape: f32[256,256], index: 5, kind: output, shape index: {0}]
  %s6 = inlined_call_operand.hbm [shape: f32[256,256], index: 6, kind: output, shape index: {1}]
  %7 = xla_tuple %s5, %s6
  %s8 = sld [smem:[#allocation0]]
  $region61: #{self_attention_pallas.3} parent=0
    _
  %s10 = ssub.s32 1, %s8
  %s11 = scalar_select 0, %s10, %s8
  $region1: #{self_attention_pallas.3} parent=0
    #allocation2 [shape = 'u8[262144]{0}', space=vmem, size = 0x40000, scoped, tag = 'output window, operand 0']
    #allocation3 [shape = 's32[2]{0}', space=sflag, size = 0x8, scoped, tag = 'scoped memory for self_attention_pallas.3']
    #allocation4 [shape = 'u8[262144]{0}', space=vmem, size = 0x40000, scoped, tag = 'output window, operand 1']
    #allocation5 [shape = 's32[2]{0}', space=sflag, size = 0x8, scoped, tag = 'scoped memory for self_attention_pallas.3']
    %12 = vsyncpa [#allocation3], 0
    %s13 = scalar_lea.sflag [#allocation3], 1
    %14 = vsyncpa %s13, 0
    %15 = vsyncpa [#allocation5], 0
    %s16 = scalar_lea.sflag [#allocation5], 1
    %17 = vsyncpa %s16, 0
    loop: start=0, step=1, limit=4
    $region2: #{self_attention_pallas.3} parent=1 // loop_pre_header
      _
    $region3: #{self_attention_pallas.3} parent=1 // loop_header
      %s19 = sphi 0, %s23
      %p20 = scmp.ge.s32.totalorder %s19, 4
      %s29 = sphi 0, %s31
      %s32 = sphi 0, %s29
      %s33 = sphi 0, %s32
      %s49 = sphi 0, %s33
      %s53 = sphi 0, %s53
      %s55 = sphi 0, %s53
      %s56 = sphi 0, %s55
      %s70 = sphi 0, %s56
      %s74 = sphi 0, %s74
      %s76 = sphi 0, %s74
      %s77 = sphi 0, %s76
      %s91 = sphi 0, %s77
      %s95 = sphi 0, %s95
      %s97 = sphi 0, %s95
      %s98 = sphi 0, %s97
      %s112 = sphi 0, %s98
      %s116 = sphi 0, %s116
      %s118 = sphi 0, %s116
      %s119 = sphi 0, %s118
      %s133 = sphi 0, %s119
      %s139 = sphi 0, %s141
      %s142 = sphi 0, %s139
      %s143 = sphi 0, %s142
      %s159 = sphi 0, %s143
      %s165 = sphi 0, %s167
      %s168 = sphi 0, %s165
      %s169 = sphi 0, %s168
      %s185 = sphi 0, %s169
    $region4: #{self_attention_pallas.3} parent=1 // loop_header_branch
      %22 = sbr.rel (%p20) target = $region8
    $region5: #{self_attention_pallas.3} parent=1 // loop_body
      %s24 = ssub.s32 %s19, 1
      %s25 = ssub.s32 %s19, 2
      %s26 = sadd.s32 %s19, 1
      %s27 = ssub.s32 %s19, %s26
      %p28 = scmp.eq.s32.totalorder %s27, 0
      %s30 = sadd.s32 %s29, 1
      %s31 = scalar_select %p28, %s29, %s30
      %p34 = pneg %p28
      %p35 = scmp.eq.s32.totalorder %s19, 1
      %p36 = por %p34, %p35
      %p37 = scmp.ne.s32.totalorder %s29, %s32
      %p38 = scmp.eq.s32.totalorder %s19, 0
      %p39 = por %p37, %p38
      %p40 = scmp.ne.s32.totalorder %s29, %s32
      %p41 = scmp.eq.s32.totalorder %s24, 1
      %p42 = por %p40, %p41
      %p43 = scmp.ne.s32.totalorder %s32, %s33
      %p44 = scmp.eq.s32.totalorder %s24, 0
      %p45 = por %p43, %p44
      %p46 = scmp.ne.s32.totalorder %s32, %s33
      %p47 = scmp.eq.s32.totalorder %s25, 1
      %p48 = por %p46, %p47
      %p50 = scmp.ne.s32.totalorder %s33, %s49
      %p51 = scmp.eq.s32.totalorder %s25, 0
      %p52 = por %p50, %p51
      %s54 = sadd.s32 %s53, 1
      %p57 = scmp.eq.s32.totalorder %s19, 1
      %p58 = scmp.ne.s32.totalorder %s53, %s55
      %p59 = scmp.eq.s32.totalorder %s19, 0
      %p60 = por %p58, %p59
      %p61 = scmp.ne.s32.totalorder %s53, %s55
      %p62 = scmp.eq.s32.totalorder %s24, 1
      %p63 = por %p61, %p62
      %p64 = scmp.ne.s32.totalorder %s55, %s56
      %p65 = scmp.eq.s32.totalorder %s24, 0
      %p66 = por %p64, %p65
      %p67 = scmp.ne.s32.totalorder %s55, %s56
      %p68 = scmp.eq.s32.totalorder %s25, 1
      %p69 = por %p67, %p68
      %p71 = scmp.ne.s32.totalorder %s56, %s70
      %p72 = scmp.eq.s32.totalorder %s25, 0
      %p73 = por %p71, %p72
      %s75 = sadd.s32 %s74, 1
      %p78 = scmp.eq.s32.totalorder %s19, 1
      %p79 = scmp.ne.s32.totalorder %s74, %s76
      %p80 = scmp.eq.s32.totalorder %s19, 0
      %p81 = por %p79, %p80
      %p82 = scmp.ne.s32.totalorder %s74, %s76
      %p83 = scmp.eq.s32.totalorder %s24, 1
      %p84 = por %p82, %p83
      %p85 = scmp.ne.s32.totalorder %s76, %s77
      %p86 = scmp.eq.s32.totalorder %s24, 0
      %p87 = por %p85, %p86
      %p88 = scmp.ne.s32.totalorder %s76, %s77
      %p89 = scmp.eq.s32.totalorder %s25, 1
      %p90 = por %p88, %p89
      %p92 = scmp.ne.s32.totalorder %s77, %s91
      %p93 = scmp.eq.s32.totalorder %s25, 0
      %p94 = por %p92, %p93
      %s96 = sadd.s32 %s95, 1
      %p99 = scmp.eq.s32.totalorder %s19, 1
      %p100 = scmp.ne.s32.totalorder %s95, %s97
      %p101 = scmp.eq.s32.totalorder %s19, 0
      %p102 = por %p100, %p101
      %p103 = scmp.ne.s32.totalorder %s95, %s97
      %p104 = scmp.eq.s32.totalorder %s24, 1
      %p105 = por %p103, %p104
      %p106 = scmp.ne.s32.totalorder %s97, %s98
      %p107 = scmp.eq.s32.totalorder %s24, 0
      %p108 = por %p106, %p107
      %p109 = scmp.ne.s32.totalorder %s97, %s98
      %p110 = scmp.eq.s32.totalorder %s25, 1
      %p111 = por %p109, %p110
      %p113 = scmp.ne.s32.totalorder %s98, %s112
      %p114 = scmp.eq.s32.totalorder %s25, 0
      %p115 = por %p113, %p114
      %s117 = sadd.s32 %s116, 1
      %p120 = scmp.eq.s32.totalorder %s19, 1
      %p121 = scmp.ne.s32.totalorder %s116, %s118
      %p122 = scmp.eq.s32.totalorder %s19, 0
      %p123 = por %p121, %p122
      %p124 = scmp.ne.s32.totalorder %s116, %s118
      %p125 = scmp.eq.s32.totalorder %s24, 1
      %p126 = por %p124, %p125
      %p127 = scmp.ne.s32.totalorder %s118, %s119
      %p128 = scmp.eq.s32.totalorder %s24, 0
      %p129 = por %p127, %p128
      %p130 = scmp.ne.s32.totalorder %s118, %s119
      %p131 = scmp.eq.s32.totalorder %s25, 1
      %p132 = por %p130, %p131
      %p134 = scmp.ne.s32.totalorder %s119, %s133
      %p135 = scmp.eq.s32.totalorder %s25, 0
      %p136 = por %p134, %p135
      %s137 = ssub.s32 %s19, %s26
      %p138 = scmp.eq.s32.totalorder %s137, 0
      %s140 = sadd.s32 %s139, 1
      %s141 = scalar_select %p138, %s139, %s140
      %p144 = pneg %p138
      %p145 = scmp.eq.s32.totalorder %s19, 1
      %p146 = por %p144, %p145
      %p147 = scmp.ne.s32.totalorder %s139, %s142
      %p148 = scmp.eq.s32.totalorder %s19, 0
      %p149 = por %p147, %p148
      %p150 = scmp.ne.s32.totalorder %s139, %s142
      %p151 = scmp.eq.s32.totalorder %s24, 1
      %p152 = por %p150, %p151
      %p153 = scmp.ne.s32.totalorder %s142, %s143
      %p154 = scmp.eq.s32.totalorder %s24, 0
      %p155 = por %p153, %p154
      %p156 = scmp.ne.s32.totalorder %s142, %s143
      %p157 = scmp.eq.s32.totalorder %s25, 1
      %p158 = por %p156, %p157
      %p160 = scmp.ne.s32.totalorder %s143, %s159
      %p161 = scmp.eq.s32.totalorder %s25, 0
      %p162 = por %p160, %p161
      %s163 = ssub.s32 %s19, %s26
      %p164 = scmp.eq.s32.totalorder %s163, 0
      %s166 = sadd.s32 %s165, 1
      %s167 = scalar_select %p164, %s165, %s166
      %p170 = pneg %p164
      %p171 = scmp.eq.s32.totalorder %s19, 1
      %p172 = por %p170, %p171
      %p173 = scmp.ne.s32.totalorder %s165, %s168
      %p174 = scmp.eq.s32.totalorder %s19, 0
      %p175 = por %p173, %p174
      %p176 = scmp.ne.s32.totalorder %s165, %s168
      %p177 = scmp.eq.s32.totalorder %s24, 1
      %p178 = por %p176, %p177
      %p179 = scmp.ne.s32.totalorder %s168, %s169
      %p180 = scmp.eq.s32.totalorder %s24, 0
      %p181 = por %p179, %p180
      %p182 = scmp.ne.s32.totalorder %s168, %s169
      %p183 = scmp.eq.s32.totalorder %s25, 1
      %p184 = por %p182, %p183
      %p186 = scmp.ne.s32.totalorder %s169, %s185
      %p187 = scmp.eq.s32.totalorder %s25, 0
      %p188 = por %p186, %p187
      %p189 = scmp.le.s32.totalorder 1, %s19
      %p190 = scmp.lt.s32.totalorder %s19, 3
      %p191 = pnand %p189, %p190
      %p192 = pneg %p191
      // Predicated region
      $region9: #{self_attention_pallas.3} parent=5 // pred_check
        _
      $region10: #{self_attention_pallas.3} parent=5 // pred_check_branch
        %194 = sbr.rel (%p191) target = $region12
      $region11: #{self_attention_pallas.3} parent=5 // pred_region
        %s195 = ssub.s32 %s19, 1
        // Predicated region
        $region13: #{self_attention_pallas.3} parent=11 // pred_check
          %p196 = pneg %p66
        $region14: #{self_attention_pallas.3} parent=11 // pred_check_branch
          %198 = sbr.rel (%p196) target = $region16
        $region15: #{self_attention_pallas.3} parent=11 // pred_region
          _
        $region16: #{self_attention_pallas.3} parent=11 // pred_fallthru
          _
        // Predicated region
        $region17: #{self_attention_pallas.3} parent=11 // pred_check
          %p199 = pneg %p87
        $region18: #{self_attention_pallas.3} parent=11 // pred_check_branch
          %201 = sbr.rel (%p199) target = $region20
        $region19: #{self_attention_pallas.3} parent=11 // pred_region
          _
        $region20: #{self_attention_pallas.3} parent=11 // pred_fallthru
          _
        // Predicated region
        $region21: #{self_attention_pallas.3} parent=11 // pred_check
          %p202 = pneg %p108
        $region22: #{self_attention_pallas.3} parent=11 // pred_check_branch
          %204 = sbr.rel (%p202) target = $region24
        $region23: #{self_attention_pallas.3} parent=11 // pred_region
          _
        $region24: #{self_attention_pallas.3} parent=11 // pred_fallthru
          _
        // Predicated region
        $region25: #{self_attention_pallas.3} parent=11 // pred_check
          %p205 = pneg %p129
        $region26: #{self_attention_pallas.3} parent=11 // pred_check_branch
          %207 = sbr.rel (%p205) target = $region28
        $region27: #{self_attention_pallas.3} parent=11 // pred_region
          _
        $region28: #{self_attention_pallas.3} parent=11 // pred_fallthru
          _
      $region12: #{self_attention_pallas.3} parent=5 // pred_fallthru
        _
      %p208 = scmp.lt.s32.totalorder %s19, 2
      // Predicated region
      $region29: #{self_attention_pallas.3} parent=5 // pred_check
        %p209 = pneg %p208
      $region30: #{self_attention_pallas.3} parent=5 // pred_check_branch
        %211 = sbr.rel (%p209) target = $region32
      $region31: #{self_attention_pallas.3} parent=5 // pred_region
        // Predicated region
        $region33: #{self_attention_pallas.3} parent=31 // pred_check
          %p212 = pneg %p39
        $region34: #{self_attention_pallas.3} parent=31 // pred_check_branch
          %214 = sbr.rel (%p212) target = $region36
        $region35: #{self_attention_pallas.3} parent=31 // pred_region
          %s215 = smul.u32 16, %s19
          %p216 = scmp.lt.s32.totalorder %s215, 31
          %s217 = scalar_select %p216, %s215, 31
          %s218 = smul.addr %s217, 2
          %s219 = smul.addr %s218, 4
          %s220 = scalar_lea.vmem %s0, %s219
          %s221 = smul.u32 16, %s19
        $region36: #{self_attention_pallas.3} parent=31 // pred_fallthru
          _
      $region32: #{self_attention_pallas.3} parent=5 // pred_fallthru
        _
      %p222 = scmp.le.s32.totalorder 1, %s19
      %p223 = scmp.lt.s32.totalorder %s19, 3
      %p224 = pnand %p222, %p223
      %p225 = pneg %p224
      // Predicated region
      $region37: #{self_attention_pallas.3} parent=5 // pred_check
        _
      $region38: #{self_attention_pallas.3} parent=5 // pred_check_branch
        %227 = sbr.rel (%p224) target = $region40
      $region39: #{self_attention_pallas.3} parent=5 // pred_region
        %s228 = ssub.s32 %s19, 1
        %s229 = smul.u32 16, %s24
        %p230 = scmp.lt.s32.totalorder %s229, 31
        %s231 = scalar_select %p230, %s229, 31
        %s232 = smul.addr %s231, 2
        %s233 = smul.addr %s232, 4
        %s234 = scalar_lea.vmem %s0, %s233
        %p235 = pneg %p45
        %p236 = pneg %p42
        %p237 = pneg %p66
        %p238 = pneg %p63
        %p239 = pneg %p87
        %p240 = pneg %p84
        %p241 = pneg %p108
        %p242 = pneg %p105
        %p243 = pneg %p129
        %p244 = pneg %p126
        %p245 = pneg %p155
        %p246 = pneg %p152
        %s247 = sand.u32 %s142, 1
        %s248 = scalar_lea.sflag [#allocation3], %s247
        %s249 = sand.u32 %s142, 1
        %s250 = smul.addr %s249, 256
        %s251 = scalar_lea.vmem [#allocation2], %s250
        %p252 = pneg %p181
        %p253 = pneg %p178
        %s254 = sand.u32 %s168, 1
        %s255 = scalar_lea.sflag [#allocation5], %s254
        %s256 = sand.u32 %s168, 1
        %s257 = smul.addr %s256, 256
        %s258 = scalar_lea.vmem [#allocation4], %s257
        %s259 = smul.u32 16, %s24
        %p260 = scmp.lt.s32.totalorder %s259, 31
        %s261 = scalar_select %p260, %s259, 31
        %s262 = smul.addr %s261, 2
        %s263 = smul.addr %s262, 4
        %s264 = scalar_lea.vmem %s0, %s263
        %s265 = smul.u32 16, %s24
        %s266 = smul.u32 16, %s24
        %s267 = smul.u32 16, %s24
        %v268 = vld [vmem:[%s264] sm:$0xff]
        %v269 = vld [vmem:[%s264 + $0x8] sm:$0xff]
        %v270 = vld [vmem:[%s264 + $0x10] sm:$0xff]
        %v271 = vld [vmem:[%s264 + $0x18] sm:$0xff]
        %v272 = vld [vmem:[%s264 + $0x20] sm:$0xff]
        %v273 = vld [vmem:[%s264 + $0x28] sm:$0xff]
        %v274 = vld [vmem:[%s264 + $0x30] sm:$0xff]
        %v275 = vld [vmem:[%s264 + $0x38] sm:$0xff]
        %v276 = vld [vmem:[%s264 + $0x40] sm:$0xff]
        %v277 = vld [vmem:[%s264 + $0x48] sm:$0xff]
        %v278 = vld [vmem:[%s264 + $0x50] sm:$0xff]
        %v279 = vld [vmem:[%s264 + $0x58] sm:$0xff]
        %v280 = vld [vmem:[%s264 + $0x60] sm:$0xff]
        %v281 = vld [vmem:[%s264 + $0x68] sm:$0xff]
        %v282 = vld [vmem:[%s264 + $0x70] sm:$0xff]
        %v283 = vld [vmem:[%s264 + $0x78] sm:$0xff]
        %v284 = vld [vmem:[%s3] sm:$0xf]
        %v285 = vld [vmem:[%s3 + $0x4] sm:$0xf]
        %v286 = vld [vmem:[%s3 + $0x8] sm:$0xf]
        %v287 = vld [vmem:[%s3 + $0xc] sm:$0xf]
        %v288 = vld [vmem:[%s3 + $0x10] sm:$0xf]
        %v289 = vld [vmem:[%s3 + $0x14] sm:$0xf]
        %v290 = vld [vmem:[%s3 + $0x18] sm:$0xf]
        %v291 = vld [vmem:[%s3 + $0x1c] sm:$0xf]
        %v292 = vld [vmem:[%s3 + $0x20] sm:$0xf]
        %v293 = vld [vmem:[%s3 + $0x24] sm:$0xf]
        %v294 = vld [vmem:[%s3 + $0x28] sm:$0xf]
        %v295 = vld [vmem:[%s3 + $0x2c] sm:$0xf]
        %v296 = vld [vmem:[%s3 + $0x30] sm:$0xf]
        %v297 = vld [vmem:[%s3 + $0x34] sm:$0xf]
        %v298 = vld [vmem:[%s3 + $0x38] sm:$0xf]
        %v299 = vld [vmem:[%s3 + $0x3c] sm:$0xf]
        %v300 = vld [vmem:[%s3 + $0x40] sm:$0xf]
        %v301 = vld [vmem:[%s3 + $0x44] sm:$0xf]
        %v302 = vld [vmem:[%s3 + $0x48] sm:$0xf]
        %v303 = vld [vmem:[%s3 + $0x4c] sm:$0xf]
        %v304 = vld [vmem:[%s3 + $0x50] sm:$0xf]
        %v305 = vld [vmem:[%s3 + $0x54] sm:$0xf]
        %v306 = vld [vmem:[%s3 + $0x58] sm:$0xf]
        %v307 = vld [vmem:[%s3 + $0x5c] sm:$0xf]
        %v308 = vld [vmem:[%s3 + $0x60] sm:$0xf]
        %v309 = vld [vmem:[%s3 + $0x64] sm:$0xf]
        %v310 = vld [vmem:[%s3 + $0x68] sm:$0xf]
        %v311 = vld [vmem:[%s3 + $0x6c] sm:$0xf]
        %v312 = vld [vmem:[%s3 + $0x70] sm:$0xf]
        %v313 = vld [vmem:[%s3 + $0x74] sm:$0xf]
        %v314 = vld [vmem:[%s3 + $0x78] sm:$0xf]
        %v315 = vld [vmem:[%s3 + $0x7c] sm:$0xf]
        %v332 = vunpack.c.l.b16 %v268
        %v333 = vunpack.c.h.b16 %v268
        %v334 = vunpack.c.l.b16 %v269
        %v335 = vunpack.c.h.b16 %v269
        %v336 = vunpack.c.l.b16 %v270
        %v337 = vunpack.c.h.b16 %v270
        %v338 = vunpack.c.l.b16 %v271
        %v339 = vunpack.c.h.b16 %v271
        %v340 = vunpack.c.l.b16 %v272
        %v341 = vunpack.c.h.b16 %v272
        %v342 = vunpack.c.l.b16 %v273
        %v343 = vunpack.c.h.b16 %v273
        %v344 = vunpack.c.l.b16 %v274
        %v345 = vunpack.c.h.b16 %v274
        %v346 = vunpack.c.l.b16 %v275
        %v347 = vunpack.c.h.b16 %v275
        %v348 = vunpack.c.l.b16 %v276
        %v349 = vunpack.c.h.b16 %v276
        %v350 = vunpack.c.l.b16 %v277
        %v351 = vunpack.c.h.b16 %v277
        %v352 = vunpack.c.l.b16 %v278
        %v353 = vunpack.c.h.b16 %v278
        %v354 = vunpack.c.l.b16 %v279
        %v355 = vunpack.c.h.b16 %v279
        %v356 = vunpack.c.l.b16 %v280
        %v357 = vunpack.c.h.b16 %v280
        %v358 = vunpack.c.l.b16 %v281
        %v359 = vunpack.c.h.b16 %v281
        %v360 = vunpack.c.l.b16 %v282
        %v361 = vunpack.c.h.b16 %v282
        %v362 = vunpack.c.l.b16 %v283
        %v363 = vunpack.c.h.b16 %v283
        %v364 = vpack.c.b16 %v334, %v332
        %v365 = vpack.c.b16 %v335, %v333
        %v366 = vpack.c.b16 %v338, %v336
        %v367 = vpack.c.b16 %v339, %v337
        %v368 = vpack.c.b16 %v342, %v340
        %v369 = vpack.c.b16 %v343, %v341
        %v370 = vpack.c.b16 %v346, %v344
        %v371 = vpack.c.b16 %v347, %v345
        %v372 = vpack.c.b16 %v350, %v348
        %v373 = vpack.c.b16 %v351, %v349
        %v374 = vpack.c.b16 %v354, %v352
        %v375 = vpack.c.b16 %v355, %v353
        %v376 = vpack.c.b16 %v358, %v356
        %v377 = vpack.c.b16 %v359, %v357
        %v378 = vpack.c.b16 %v362, %v360
        %v379 = vpack.c.b16 %v363, %v361
        %v428 = vunpack.c.l.b16 %v284
        %v429 = vunpack.c.l.b16 %v285
        %v430 = vunpack.c.l.b16 %v286
        %v431 = vunpack.c.l.b16 %v287
        %v432 = vunpack.c.l.b16 %v288
        %v433 = vunpack.c.l.b16 %v289
        %v434 = vunpack.c.l.b16 %v290
        %v435 = vunpack.c.l.b16 %v291
        %v436 = vunpack.c.l.b16 %v292
        %v437 = vunpack.c.l.b16 %v293
        %v438 = vunpack.c.l.b16 %v294
        %v439 = vunpack.c.l.b16 %v295
        %v440 = vunpack.c.l.b16 %v296
        %v441 = vunpack.c.l.b16 %v297
        %v442 = vunpack.c.l.b16 %v298
        %v443 = vunpack.c.l.b16 %v299
        %v444 = vunpack.c.l.b16 %v300
        %v445 = vunpack.c.l.b16 %v301
        %v446 = vunpack.c.l.b16 %v302
        %v447 = vunpack.c.l.b16 %v303
        %v448 = vunpack.c.l.b16 %v304
        %v449 = vunpack.c.l.b16 %v305
        %v450 = vunpack.c.l.b16 %v306
        %v451 = vunpack.c.l.b16 %v307
        %v452 = vunpack.c.l.b16 %v308
        %v453 = vunpack.c.l.b16 %v309
        %v454 = vunpack.c.l.b16 %v310
        %v455 = vunpack.c.l.b16 %v311
        %v456 = vunpack.c.l.b16 %v312
        %v457 = vunpack.c.l.b16 %v313
        %v458 = vunpack.c.l.b16 %v314
        %v459 = vunpack.c.l.b16 %v315
        %v460 = vpack.c.b16 %v429, %v428
        %v461 = vpack.c.b16 %v431, %v430
        %v462 = vpack.c.b16 %v433, %v432
        %v463 = vpack.c.b16 %v435, %v434
        %v464 = vpack.c.b16 %v437, %v436
        %v465 = vpack.c.b16 %v439, %v438
        %v466 = vpack.c.b16 %v441, %v440
        %v467 = vpack.c.b16 %v443, %v442
        %v468 = vpack.c.b16 %v445, %v444
        %v469 = vpack.c.b16 %v447, %v446
        %v470 = vpack.c.b16 %v449, %v448
        %v471 = vpack.c.b16 %v451, %v450
        %v472 = vpack.c.b16 %v453, %v452
        %v473 = vpack.c.b16 %v455, %v454
        %v474 = vpack.c.b16 %v457, %v456
        %v475 = vpack.c.b16 %v459, %v458
        %492 = vmatpush.bf16.msra.mxu0 %v467
        %493 = vmatpush.bf16.msra.mxu0 %v466
        %494 = vmatpush.bf16.msra.mxu0 %v465
        %495 = vmatpush.bf16.msra.mxu0 %v464
        %496 = vmatpush.bf16.msra.mxu0 %v463
        %497 = vmatpush.bf16.msra.mxu0 %v462
        %498 = vmatpush.bf16.msra.mxu0 %v461
        %499 = vmatpush.bf16.msra.mxu0 %v460
        %500 = vmatmul.bf16.gmra.mxu0 %v364
        %v501 = vpop.f32.mrf.mxu0
        %v502 = vadd.f32 0.0, %v501
        %v503 = vpop.f32.mrf.mxu0
        %v504 = vadd.f32 0.0, %v503
        %505 = vmatmul.bf16.gmra.mxu0 %v366
        %v506 = vpop.f32.mrf.mxu0
        %v507 = vadd.f32 0.0, %v506
        %v508 = vpop.f32.mrf.mxu0
        %v509 = vadd.f32 0.0, %v508
        %510 = vmatmul.bf16.gmra.mxu0 %v368
        %v511 = vpop.f32.mrf.mxu0
        %v512 = vadd.f32 0.0, %v511
        %v513 = vpop.f32.mrf.mxu0
        %v514 = vadd.f32 0.0, %v513
        %515 = vmatmul.bf16.gmra.mxu0 %v370
        %v516 = vpop.f32.mrf.mxu0
        %v517 = vadd.f32 0.0, %v516
        %v518 = vpop.f32.mrf.mxu0
        %v519 = vadd.f32 0.0, %v518
        %520 = vmatmul.bf16.gmra.mxu0 %v372
        %v521 = vpop.f32.mrf.mxu0
        %v522 = vadd.f32 0.0, %v521
        %v523 = vpop.f32.mrf.mxu0
        %v524 = vadd.f32 0.0, %v523
        %525 = vmatmul.bf16.gmra.mxu0 %v374
        %v526 = vpop.f32.mrf.mxu0
        %v527 = vadd.f32 0.0, %v526
        %v528 = vpop.f32.mrf.mxu0
        %v529 = vadd.f32 0.0, %v528
        %530 = vmatmul.bf16.gmra.mxu0 %v376
        %v531 = vpop.f32.mrf.mxu0
        %v532 = vadd.f32 0.0, %v531
        %v533 = vpop.f32.mrf.mxu0
        %v534 = vadd.f32 0.0, %v533
        %535 = vmatmul.bf16.gmra.mxu0 %v378
        %v536 = vpop.f32.mrf.mxu0
        %v537 = vadd.f32 0.0, %v536
        %v538 = vpop.f32.mrf.mxu0
        %v539 = vadd.f32 0.0, %v538
        %540 = vdwg.mxu0
        %541 = vmatpush.bf16.msra.mxu0 %v475
        %542 = vmatpush.bf16.msra.mxu0 %v474
        %543 = vmatpush.bf16.msra.mxu0 %v473
        %544 = vmatpush.bf16.msra.mxu0 %v472
        %545 = vmatpush.bf16.msra.mxu0 %v471
        %546 = vmatpush.bf16.msra.mxu0 %v470
        %547 = vmatpush.bf16.msra.mxu0 %v469
        %548 = vmatpush.bf16.msra.mxu0 %v468
        %549 = vmatmul.bf16.gmra.mxu0 %v365
        %v550 = vpop.f32.mrf.mxu0
        %v551 = vadd.f32 %v502, %v550
        %v552 = vpop.f32.mrf.mxu0
        %v553 = vadd.f32 %v504, %v552
        %554 = vmatmul.bf16.gmra.mxu0 %v367
        %v555 = vpop.f32.mrf.mxu0
        %v556 = vadd.f32 %v507, %v555
        %v557 = vpop.f32.mrf.mxu0
        %v558 = vadd.f32 %v509, %v557
        %559 = vmatmul.bf16.gmra.mxu0 %v369
        %v560 = vpop.f32.mrf.mxu0
        %v561 = vadd.f32 %v512, %v560
        %v562 = vpop.f32.mrf.mxu0
        %v563 = vadd.f32 %v514, %v562
        %564 = vmatmul.bf16.gmra.mxu0 %v371
        %v565 = vpop.f32.mrf.mxu0
        %v566 = vadd.f32 %v517, %v565
        %v567 = vpop.f32.mrf.mxu0
        %v568 = vadd.f32 %v519, %v567
        %569 = vmatmul.bf16.gmra.mxu0 %v373
        %v570 = vpop.f32.mrf.mxu0
        %v571 = vadd.f32 %v522, %v570
        %v572 = vpop.f32.mrf.mxu0
        %v573 = vadd.f32 %v524, %v572
        %574 = vmatmul.bf16.gmra.mxu0 %v375
        %v575 = vpop.f32.mrf.mxu0
        %v576 = vadd.f32 %v527, %v575
        %v577 = vpop.f32.mrf.mxu0
        %v578 = vadd.f32 %v529, %v577
        %579 = vmatmul.bf16.gmra.mxu0 %v377
        %v580 = vpop.f32.mrf.mxu0
        %v581 = vadd.f32 %v532, %v580
        %v582 = vpop.f32.mrf.mxu0
        %v583 = vadd.f32 %v534, %v582
        %584 = vmatmul.bf16.gmra.mxu0 %v379
        %v585 = vpop.f32.mrf.mxu0
        %v586 = vadd.f32 %v537, %v585
        %v587 = vpop.f32.mrf.mxu0
        %v588 = vadd.f32 %v539, %v587
        %589 = vdwg.mxu0
        %v590 = vpack.c.bf16 %v553, %v551
        %v591 = vpack.c.bf16 %v558, %v556
        %v592 = vpack.c.bf16 %v563, %v561
        %v593 = vpack.c.bf16 %v568, %v566
        %v594 = vpack.c.bf16 %v573, %v571
        %v595 = vpack.c.bf16 %v578, %v576
        %v596 = vpack.c.bf16 %v583, %v581
        %v597 = vpack.c.bf16 %v588, %v586
        %v598 = vld [vmem:[%s1] sm:$0xf]
        %v599 = vld [vmem:[%s1 + $0x4] sm:$0xf]
        %v600 = vld [vmem:[%s1 + $0x8] sm:$0xf]
        %v601 = vld [vmem:[%s1 + $0xc] sm:$0xf]
        %v602 = vld [vmem:[%s1 + $0x10] sm:$0xf]
        %v603 = vld [vmem:[%s1 + $0x14] sm:$0xf]
        %v604 = vld [vmem:[%s1 + $0x18] sm:$0xf]
        %v605 = vld [vmem:[%s1 + $0x1c] sm:$0xf]
        %v606 = vld [vmem:[%s1 + $0x20] sm:$0xf]
        %v607 = vld [vmem:[%s1 + $0x24] sm:$0xf]
        %v608 = vld [vmem:[%s1 + $0x28] sm:$0xf]
        %v609 = vld [vmem:[%s1 + $0x2c] sm:$0xf]
        %v610 = vld [vmem:[%s1 + $0x30] sm:$0xf]
        %v611 = vld [vmem:[%s1 + $0x34] sm:$0xf]
        %v612 = vld [vmem:[%s1 + $0x38] sm:$0xf]
        %v613 = vld [vmem:[%s1 + $0x3c] sm:$0xf]
        %v614 = vld [vmem:[%s1 + $0x40] sm:$0xf]
        %v615 = vld [vmem:[%s1 + $0x44] sm:$0xf]
        %v616 = vld [vmem:[%s1 + $0x48] sm:$0xf]
        %v617 = vld [vmem:[%s1 + $0x4c] sm:$0xf]
        %v618 = vld [vmem:[%s1 + $0x50] sm:$0xf]
        %v619 = vld [vmem:[%s1 + $0x54] sm:$0xf]
        %v620 = vld [vmem:[%s1 + $0x58] sm:$0xf]
        %v621 = vld [vmem:[%s1 + $0x5c] sm:$0xf]
        %v622 = vld [vmem:[%s1 + $0x60] sm:$0xf]
        %v623 = vld [vmem:[%s1 + $0x64] sm:$0xf]
        %v624 = vld [vmem:[%s1 + $0x68] sm:$0xf]
        %v625 = vld [vmem:[%s1 + $0x6c] sm:$0xf]
        %v626 = vld [vmem:[%s1 + $0x70] sm:$0xf]
        %v627 = vld [vmem:[%s1 + $0x74] sm:$0xf]
        %v628 = vld [vmem:[%s1 + $0x78] sm:$0xf]
        %v629 = vld [vmem:[%s1 + $0x7c] sm:$0xf]
        %v662 = vunpack.c.l.b16 %v598
        %v663 = vunpack.c.l.b16 %v599
        %v664 = vunpack.c.l.b16 %v600
        %v665 = vunpack.c.l.b16 %v601
        %v666 = vunpack.c.l.b16 %v602
        %v667 = vunpack.c.l.b16 %v603
        %v668 = vunpack.c.l.b16 %v604
        %v669 = vunpack.c.l.b16 %v605
        %v670 = vunpack.c.l.b16 %v606
        %v671 = vunpack.c.l.b16 %v607
        %v672 = vunpack.c.l.b16 %v608
        %v673 = vunpack.c.l.b16 %v609
        %v674 = vunpack.c.l.b16 %v610
        %v675 = vunpack.c.l.b16 %v611
        %v676 = vunpack.c.l.b16 %v612
        %v677 = vunpack.c.l.b16 %v613
        %v678 = vunpack.c.l.b16 %v614
        %v679 = vunpack.c.l.b16 %v615
        %v680 = vunpack.c.l.b16 %v616
        %v681 = vunpack.c.l.b16 %v617
        %v682 = vunpack.c.l.b16 %v618
        %v683 = vunpack.c.l.b16 %v619
        %v684 = vunpack.c.l.b16 %v620
        %v685 = vunpack.c.l.b16 %v621
        %v686 = vunpack.c.l.b16 %v622
        %v687 = vunpack.c.l.b16 %v623
        %v688 = vunpack.c.l.b16 %v624
        %v689 = vunpack.c.l.b16 %v625
        %v690 = vunpack.c.l.b16 %v626
        %v691 = vunpack.c.l.b16 %v627
        %v692 = vunpack.c.l.b16 %v628
        %v693 = vunpack.c.l.b16 %v629
        %v694 = vpack.c.b16 %v663, %v662
        %v695 = vpack.c.b16 %v665, %v664
        %v696 = vpack.c.b16 %v667, %v666
        %v697 = vpack.c.b16 %v669, %v668
        %v698 = vpack.c.b16 %v671, %v670
        %v699 = vpack.c.b16 %v673, %v672
        %v700 = vpack.c.b16 %v675, %v674
        %v701 = vpack.c.b16 %v677, %v676
        %v702 = vpack.c.b16 %v679, %v678
        %v703 = vpack.c.b16 %v681, %v680
        %v704 = vpack.c.b16 %v683, %v682
        %v705 = vpack.c.b16 %v685, %v684
        %v706 = vpack.c.b16 %v687, %v686
        %v707 = vpack.c.b16 %v689, %v688
        %v708 = vpack.c.b16 %v691, %v690
        %v709 = vpack.c.b16 %v693, %v692
        %726 = vmatpush.bf16.xpose.msra.mxu0 %v701
        %727 = vmatpush.bf16.xpose.msra.mxu0 %v700
        %728 = vmatpush.bf16.xpose.msra.mxu0 %v699
        %729 = vmatpush.bf16.xpose.msra.mxu0 %v698
        %730 = vmatpush.bf16.xpose.msra.mxu0 %v697
        %731 = vmatpush.bf16.xpose.msra.mxu0 %v696
        %732 = vmatpush.bf16.xpose.msra.mxu0 %v695
        %733 = vmatpush.bf16.xpose.msra.mxu0 %v694
        %734 = vmatmul.bf16.gmra.mxu0 %v590
        %v735 = vpop.f32.mrf.mxu0
        %v736 = vadd.f32 0.0, %v735
        %v737 = vpop.f32.mrf.mxu0
        %v738 = vadd.f32 0.0, %v737
        %739 = vmatmul.bf16.gmra.mxu0 %v591
        %v740 = vpop.f32.mrf.mxu0
        %v741 = vadd.f32 0.0, %v740
        %v742 = vpop.f32.mrf.mxu0
        %v743 = vadd.f32 0.0, %v742
        %744 = vmatmul.bf16.gmra.mxu0 %v592
        %v745 = vpop.f32.mrf.mxu0
        %v746 = vadd.f32 0.0, %v745
        %v747 = vpop.f32.mrf.mxu0
        %v748 = vadd.f32 0.0, %v747
        %749 = vmatmul.bf16.gmra.mxu0 %v593
        %v750 = vpop.f32.mrf.mxu0
        %v751 = vadd.f32 0.0, %v750
        %v752 = vpop.f32.mrf.mxu0
        %v753 = vadd.f32 0.0, %v752
        %754 = vmatmul.bf16.gmra.mxu0 %v594
        %v755 = vpop.f32.mrf.mxu0
        %v756 = vadd.f32 0.0, %v755
        %v757 = vpop.f32.mrf.mxu0
        %v758 = vadd.f32 0.0, %v757
        %759 = vmatmul.bf16.gmra.mxu0 %v595
        %v760 = vpop.f32.mrf.mxu0
        %v761 = vadd.f32 0.0, %v760
        %v762 = vpop.f32.mrf.mxu0
        %v763 = vadd.f32 0.0, %v762
        %764 = vmatmul.bf16.gmra.mxu0 %v596
        %v765 = vpop.f32.mrf.mxu0
        %v766 = vadd.f32 0.0, %v765
        %v767 = vpop.f32.mrf.mxu0
        %v768 = vadd.f32 0.0, %v767
        %769 = vmatmul.bf16.gmra.mxu0 %v597
        %v770 = vpop.f32.mrf.mxu0
        %v771 = vadd.f32 0.0, %v770
        %v772 = vpop.f32.mrf.mxu0
        %v773 = vadd.f32 0.0, %v772
        %774 = vdwg.mxu0
        %775 = vmatpush.bf16.xpose.msra.mxu0 %v709
        %776 = vmatpush.bf16.xpose.msra.mxu0 %v708
        %777 = vmatpush.bf16.xpose.msra.mxu0 %v707
        %778 = vmatpush.bf16.xpose.msra.mxu0 %v706
        %779 = vmatpush.bf16.xpose.msra.mxu0 %v705
        %780 = vmatpush.bf16.xpose.msra.mxu0 %v704
        %781 = vmatpush.bf16.xpose.msra.mxu0 %v703
        %782 = vmatpush.bf16.xpose.msra.mxu0 %v702
        %783 = vmatmul.bf16.gmra.mxu0 %v590
        %v784 = vpop.f32.mrf.mxu0
        %v785 = vadd.f32 0.0, %v784
        %v786 = vpop.f32.mrf.mxu0
        %v787 = vadd.f32 0.0, %v786
        %788 = vmatmul.bf16.gmra.mxu0 %v591
        %v789 = vpop.f32.mrf.mxu0
        %v790 = vadd.f32 0.0, %v789
        %v791 = vpop.f32.mrf.mxu0
        %v792 = vadd.f32 0.0, %v791
        %793 = vmatmul.bf16.gmra.mxu0 %v592
        %v794 = vpop.f32.mrf.mxu0
        %v795 = vadd.f32 0.0, %v794
        %v796 = vpop.f32.mrf.mxu0
        %v797 = vadd.f32 0.0, %v796
        %798 = vmatmul.bf16.gmra.mxu0 %v593
        %v799 = vpop.f32.mrf.mxu0
        %v800 = vadd.f32 0.0, %v799
        %v801 = vpop.f32.mrf.mxu0
        %v802 = vadd.f32 0.0, %v801
        %803 = vmatmul.bf16.gmra.mxu0 %v594
        %v804 = vpop.f32.mrf.mxu0
        %v805 = vadd.f32 0.0, %v804
        %v806 = vpop.f32.mrf.mxu0
        %v807 = vadd.f32 0.0, %v806
        %808 = vmatmul.bf16.gmra.mxu0 %v595
        %v809 = vpop.f32.mrf.mxu0
        %v810 = vadd.f32 0.0, %v809
        %v811 = vpop.f32.mrf.mxu0
        %v812 = vadd.f32 0.0, %v811
        %813 = vmatmul.bf16.gmra.mxu0 %v596
        %v814 = vpop.f32.mrf.mxu0
        %v815 = vadd.f32 0.0, %v814
        %v816 = vpop.f32.mrf.mxu0
        %v817 = vadd.f32 0.0, %v816
        %818 = vmatmul.bf16.gmra.mxu0 %v597
        %v819 = vpop.f32.mrf.mxu0
        %v820 = vadd.f32 0.0, %v819
        %v821 = vpop.f32.mrf.mxu0
        %v822 = vadd.f32 0.0, %v821
        %823 = vdwg.mxu0
        %v824 = vmax.f32 %v736, %v785
        %825 = vmax.xlane.f32.xlu0 %v824
        %v826 = vpop.xlane.xlu0 %825
        %v827 = vmax.f32 %v738, %v787
        %828 = vmax.xlane.f32.xlu0 %v827
        %v829 = vpop.xlane.xlu0 %828
        %v830 = vmax.f32 %v741, %v790
        %831 = vmax.xlane.f32.xlu0 %v830
        %v832 = vpop.xlane.xlu0 %831
        %v833 = vmax.f32 %v743, %v792
        %834 = vmax.xlane.f32.xlu0 %v833
        %v835 = vpop.xlane.xlu0 %834
        %v836 = vmax.f32 %v746, %v795
        %837 = vmax.xlane.f32.xlu0 %v836
        %v838 = vpop.xlane.xlu0 %837
        %v839 = vmax.f32 %v748, %v797
        %840 = vmax.xlane.f32.xlu0 %v839
        %v841 = vpop.xlane.xlu0 %840
        %v842 = vmax.f32 %v751, %v800
        %843 = vmax.xlane.f32.xlu0 %v842
        %v844 = vpop.xlane.xlu0 %843
        %v845 = vmax.f32 %v753, %v802
        %846 = vmax.xlane.f32.xlu0 %v845
        %v847 = vpop.xlane.xlu0 %846
        %v848 = vmax.f32 %v756, %v805
        %849 = vmax.xlane.f32.xlu0 %v848
        %v850 = vpop.xlane.xlu0 %849
        %v851 = vmax.f32 %v758, %v807
        %852 = vmax.xlane.f32.xlu0 %v851
        %v853 = vpop.xlane.xlu0 %852
        %v854 = vmax.f32 %v761, %v810
        %855 = vmax.xlane.f32.xlu0 %v854
        %v856 = vpop.xlane.xlu0 %855
        %v857 = vmax.f32 %v763, %v812
        %858 = vmax.xlane.f32.xlu0 %v857
        %v859 = vpop.xlane.xlu0 %858
        %v860 = vmax.f32 %v766, %v815
        %861 = vmax.xlane.f32.xlu0 %v860
        %v862 = vpop.xlane.xlu0 %861
        %v863 = vmax.f32 %v768, %v817
        %864 = vmax.xlane.f32.xlu0 %v863
        %v865 = vpop.xlane.xlu0 %864
        %v866 = vmax.f32 %v771, %v820
        %867 = vmax.xlane.f32.xlu0 %v866
        %v868 = vpop.xlane.xlu0 %867
        %v869 = vmax.f32 %v773, %v822
        %870 = vmax.xlane.f32.xlu0 %v869
        %v871 = vpop.xlane.xlu0 %870
        %v872 = vsub.f32 %v736, %v826
        %v873 = vsub.f32 %v785, %v826
        %v874 = vsub.f32 %v738, %v829
        %v875 = vsub.f32 %v787, %v829
        %v876 = vsub.f32 %v741, %v832
        %v877 = vsub.f32 %v790, %v832
        %v878 = vsub.f32 %v743, %v835
        %v879 = vsub.f32 %v792, %v835
        %v880 = vsub.f32 %v746, %v838
        %v881 = vsub.f32 %v795, %v838
        %v882 = vsub.f32 %v748, %v841
        %v883 = vsub.f32 %v797, %v841
        %v884 = vsub.f32 %v751, %v844
        %v885 = vsub.f32 %v800, %v844
        %v886 = vsub.f32 %v753, %v847
        %v887 = vsub.f32 %v802, %v847
        %v888 = vsub.f32 %v756, %v850
        %v889 = vsub.f32 %v805, %v850
        %v890 = vsub.f32 %v758, %v853
        %v891 = vsub.f32 %v807, %v853
        %v892 = vsub.f32 %v761, %v856
        %v893 = vsub.f32 %v810, %v856
        %v894 = vsub.f32 %v763, %v859
        %v895 = vsub.f32 %v812, %v859
        %v896 = vsub.f32 %v766, %v862
        %v897 = vsub.f32 %v815, %v862
        %v898 = vsub.f32 %v768, %v865
        %v899 = vsub.f32 %v817, %v865
        %v900 = vsub.f32 %v771, %v868
        %v901 = vsub.f32 %v820, %v868
        %v902 = vsub.f32 %v773, %v871
        %v903 = vsub.f32 %v822, %v871
        %v904 = vmul.f32 %v872, 1.442695
        %v905 = vpow.pop %v904
        %v906 = vmul.f32 %v873, 1.442695
        %v907 = vpow.pop %v906
        %v908 = vmul.f32 %v874, 1.442695
        %v909 = vpow.pop %v908
        %v910 = vmul.f32 %v875, 1.442695
        %v911 = vpow.pop %v910
        %v912 = vmul.f32 %v876, 1.442695
        %v913 = vpow.pop %v912
        %v914 = vmul.f32 %v877, 1.442695
        %v915 = vpow.pop %v914
        %v916 = vmul.f32 %v878, 1.442695
        %v917 = vpow.pop %v916
        %v918 = vmul.f32 %v879, 1.442695
        %v919 = vpow.pop %v918
        %v920 = vmul.f32 %v880, 1.442695
        %v921 = vpow.pop %v920
        %v922 = vmul.f32 %v881, 1.442695
        %v923 = vpow.pop %v922
        %v924 = vmul.f32 %v882, 1.442695
        %v925 = vpow.pop %v924
        %v926 = vmul.f32 %v883, 1.442695
        %v927 = vpow.pop %v926
        %v928 = vmul.f32 %v884, 1.442695
        %v929 = vpow.pop %v928
        %v930 = vmul.f32 %v885, 1.442695
        %v931 = vpow.pop %v930
        %v932 = vmul.f32 %v886, 1.442695
        %v933 = vpow.pop %v932
        %v934 = vmul.f32 %v887, 1.442695
        %v935 = vpow.pop %v934
        %v936 = vmul.f32 %v888, 1.442695
        %v937 = vpow.pop %v936
        %v938 = vmul.f32 %v889, 1.442695
        %v939 = vpow.pop %v938
        %v940 = vmul.f32 %v890, 1.442695
        %v941 = vpow.pop %v940
        %v942 = vmul.f32 %v891, 1.442695
        %v943 = vpow.pop %v942
        %v944 = vmul.f32 %v892, 1.442695
        %v945 = vpow.pop %v944
        %v946 = vmul.f32 %v893, 1.442695
        %v947 = vpow.pop %v946
        %v948 = vmul.f32 %v894, 1.442695
        %v949 = vpow.pop %v948
        %v950 = vmul.f32 %v895, 1.442695
        %v951 = vpow.pop %v950
        %v952 = vmul.f32 %v896, 1.442695
        %v953 = vpow.pop %v952
        %v954 = vmul.f32 %v897, 1.442695
        %v955 = vpow.pop %v954
        %v956 = vmul.f32 %v898, 1.442695
        %v957 = vpow.pop %v956
        %v958 = vmul.f32 %v899, 1.442695
        %v959 = vpow.pop %v958
        %v960 = vmul.f32 %v900, 1.442695
        %v961 = vpow.pop %v960
        %v962 = vmul.f32 %v901, 1.442695
        %v963 = vpow.pop %v962
        %v964 = vmul.f32 %v902, 1.442695
        %v965 = vpow.pop %v964
        %v966 = vmul.f32 %v903, 1.442695
        %v967 = vpow.pop %v966
        %v968 = vadd.f32 %v905, %v907
        %969 = vadd.xlane.f32.xlu0 %v968
        %v970 = vpop.xlane.xlu0 %969
        %v971 = vadd.f32 %v909, %v911
        %972 = vadd.xlane.f32.xlu0 %v971
        %v973 = vpop.xlane.xlu0 %972
        %v974 = vadd.f32 %v913, %v915
        %975 = vadd.xlane.f32.xlu0 %v974
        %v976 = vpop.xlane.xlu0 %975
        %v977 = vadd.f32 %v917, %v919
        %978 = vadd.xlane.f32.xlu0 %v977
        %v979 = vpop.xlane.xlu0 %978
        %v980 = vadd.f32 %v921, %v923
        %981 = vadd.xlane.f32.xlu0 %v980
        %v982 = vpop.xlane.xlu0 %981
        %v983 = vadd.f32 %v925, %v927
        %984 = vadd.xlane.f32.xlu0 %v983
        %v985 = vpop.xlane.xlu0 %984
        %v986 = vadd.f32 %v929, %v931
        %987 = vadd.xlane.f32.xlu0 %v986
        %v988 = vpop.xlane.xlu0 %987
        %v989 = vadd.f32 %v933, %v935
        %990 = vadd.xlane.f32.xlu0 %v989
        %v991 = vpop.xlane.xlu0 %990
        %v992 = vadd.f32 %v937, %v939
        %993 = vadd.xlane.f32.xlu0 %v992
        %v994 = vpop.xlane.xlu0 %993
        %v995 = vadd.f32 %v941, %v943
        %996 = vadd.xlane.f32.xlu0 %v995
        %v997 = vpop.xlane.xlu0 %996
        %v998 = vadd.f32 %v945, %v947
        %999 = vadd.xlane.f32.xlu0 %v998
        %v1000 = vpop.xlane.xlu0 %999
        %v1001 = vadd.f32 %v949, %v951
        %1002 = vadd.xlane.f32.xlu0 %v1001
        %v1003 = vpop.xlane.xlu0 %1002
        %v1004 = vadd.f32 %v953, %v955
        %1005 = vadd.xlane.f32.xlu0 %v1004
        %v1006 = vpop.xlane.xlu0 %1005
        %v1007 = vadd.f32 %v957, %v959
        %1008 = vadd.xlane.f32.xlu0 %v1007
        %v1009 = vpop.xlane.xlu0 %1008
        %v1010 = vadd.f32 %v961, %v963
        %1011 = vadd.xlane.f32.xlu0 %v1010
        %v1012 = vpop.xlane.xlu0 %1011
        %v1013 = vadd.f32 %v965, %v967
        %1014 = vadd.xlane.f32.xlu0 %v1013
        %v1015 = vpop.xlane.xlu0 %1014
        %v1016 = vrcp.pop %v970
        %v1017 = vrcp.pop %v973
        %v1018 = vrcp.pop %v976
        %v1019 = vrcp.pop %v979
        %v1020 = vrcp.pop %v982
        %v1021 = vrcp.pop %v985
        %v1022 = vrcp.pop %v988
        %v1023 = vrcp.pop %v991
        %v1024 = vrcp.pop %v994
        %v1025 = vrcp.pop %v997
        %v1026 = vrcp.pop %v1000
        %v1027 = vrcp.pop %v1003
        %v1028 = vrcp.pop %v1006
        %v1029 = vrcp.pop %v1009
        %v1030 = vrcp.pop %v1012
        %v1031 = vrcp.pop %v1015
        %v1032 = vmul.f32 %v905, %v1016
        %v1033 = vmul.f32 %v907, %v1016
        %v1034 = vmul.f32 %v909, %v1017
        %v1035 = vmul.f32 %v911, %v1017
        %v1036 = vmul.f32 %v913, %v1018
        %v1037 = vmul.f32 %v915, %v1018
        %v1038 = vmul.f32 %v917, %v1019
        %v1039 = vmul.f32 %v919, %v1019
        %v1040 = vmul.f32 %v921, %v1020
        %v1041 = vmul.f32 %v923, %v1020
        %v1042 = vmul.f32 %v925, %v1021
        %v1043 = vmul.f32 %v927, %v1021
        %v1044 = vmul.f32 %v929, %v1022
        %v1045 = vmul.f32 %v931, %v1022
        %v1046 = vmul.f32 %v933, %v1023
        %v1047 = vmul.f32 %v935, %v1023
        %v1048 = vmul.f32 %v937, %v1024
        %v1049 = vmul.f32 %v939, %v1024
        %v1050 = vmul.f32 %v941, %v1025
        %v1051 = vmul.f32 %v943, %v1025
        %v1052 = vmul.f32 %v945, %v1026
        %v1053 = vmul.f32 %v947, %v1026
        %v1054 = vmul.f32 %v949, %v1027
        %v1055 = vmul.f32 %v951, %v1027
        %v1056 = vmul.f32 %v953, %v1028
        %v1057 = vmul.f32 %v955, %v1028
        %v1058 = vmul.f32 %v957, %v1029
        %v1059 = vmul.f32 %v959, %v1029
        %v1060 = vmul.f32 %v961, %v1030
        %v1061 = vmul.f32 %v963, %v1030
        %v1062 = vmul.f32 %v965, %v1031
        %v1063 = vmul.f32 %v967, %v1031
        %1064 = vst [vmem:[%s258] sm:$0xff] %v1032
        %1065 = vst [vmem:[%s258 + $0x8] sm:$0xff] %v1033
        %1066 = vst [vmem:[%s258 + $0x10] sm:$0xff] %v1034
        %1067 = vst [vmem:[%s258 + $0x18] sm:$0xff] %v1035
        %1068 = vst [vmem:[%s258 + $0x20] sm:$0xff] %v1036
        %1069 = vst [vmem:[%s258 + $0x28] sm:$0xff] %v1037
        %1070 = vst [vmem:[%s258 + $0x30] sm:$0xff] %v1038
        %1071 = vst [vmem:[%s258 + $0x38] sm:$0xff] %v1039
        %1072 = vst [vmem:[%s258 + $0x40] sm:$0xff] %v1040
        %1073 = vst [vmem:[%s258 + $0x48] sm:$0xff] %v1041
        %1074 = vst [vmem:[%s258 + $0x50] sm:$0xff] %v1042
        %1075 = vst [vmem:[%s258 + $0x58] sm:$0xff] %v1043
        %1076 = vst [vmem:[%s258 + $0x60] sm:$0xff] %v1044
        %1077 = vst [vmem:[%s258 + $0x68] sm:$0xff] %v1045
        %1078 = vst [vmem:[%s258 + $0x70] sm:$0xff] %v1046
        %1079 = vst [vmem:[%s258 + $0x78] sm:$0xff] %v1047
        %1080 = vst [vmem:[%s258 + $0x80] sm:$0xff] %v1048
        %1081 = vst [vmem:[%s258 + $0x88] sm:$0xff] %v1049
        %1082 = vst [vmem:[%s258 + $0x90] sm:$0xff] %v1050
        %1083 = vst [vmem:[%s258 + $0x98] sm:$0xff] %v1051
        %1084 = vst [vmem:[%s258 + $0xa0] sm:$0xff] %v1052
        %1085 = vst [vmem:[%s258 + $0xa8] sm:$0xff] %v1053
        %1086 = vst [vmem:[%s258 + $0xb0] sm:$0xff] %v1054
        %1087 = vst [vmem:[%s258 + $0xb8] sm:$0xff] %v1055
        %1088 = vst [vmem:[%s258 + $0xc0] sm:$0xff] %v1056
        %1089 = vst [vmem:[%s258 + $0xc8] sm:$0xff] %v1057
        %1090 = vst [vmem:[%s258 + $0xd0] sm:$0xff] %v1058
        %1091 = vst [vmem:[%s258 + $0xd8] sm:$0xff] %v1059
        %1092 = vst [vmem:[%s258 + $0xe0] sm:$0xff] %v1060
        %1093 = vst [vmem:[%s258 + $0xe8] sm:$0xff] %v1061
        %1094 = vst [vmem:[%s258 + $0xf0] sm:$0xff] %v1062
        %1095 = vst [vmem:[%s258 + $0xf8] sm:$0xff] %v1063
        %v1096 = vpack.c.bf16 %v1034, %v1032
        %v1097 = vpack.c.bf16 %v1035, %v1033
        %v1098 = vpack.c.bf16 %v1038, %v1036
        %v1099 = vpack.c.bf16 %v1039, %v1037
        %v1100 = vpack.c.bf16 %v1042, %v1040
        %v1101 = vpack.c.bf16 %v1043, %v1041
        %v1102 = vpack.c.bf16 %v1046, %v1044
        %v1103 = vpack.c.bf16 %v1047, %v1045
        %v1104 = vpack.c.bf16 %v1050, %v1048
        %v1105 = vpack.c.bf16 %v1051, %v1049
        %v1106 = vpack.c.bf16 %v1054, %v1052
        %v1107 = vpack.c.bf16 %v1055, %v1053
        %v1108 = vpack.c.bf16 %v1058, %v1056
        %v1109 = vpack.c.bf16 %v1059, %v1057
        %v1110 = vpack.c.bf16 %v1062, %v1060
        %v1111 = vpack.c.bf16 %v1063, %v1061
        %v1112 = vld [vmem:[%s2] sm:$0xf]
        %v1113 = vld [vmem:[%s2 + $0x4] sm:$0xf]
        %v1114 = vld [vmem:[%s2 + $0x8] sm:$0xf]
        %v1115 = vld [vmem:[%s2 + $0xc] sm:$0xf]
        %v1116 = vld [vmem:[%s2 + $0x10] sm:$0xf]
        %v1117 = vld [vmem:[%s2 + $0x14] sm:$0xf]
        %v1118 = vld [vmem:[%s2 + $0x18] sm:$0xf]
        %v1119 = vld [vmem:[%s2 + $0x1c] sm:$0xf]
        %v1120 = vld [vmem:[%s2 + $0x20] sm:$0xf]
        %v1121 = vld [vmem:[%s2 + $0x24] sm:$0xf]
        %v1122 = vld [vmem:[%s2 + $0x28] sm:$0xf]
        %v1123 = vld [vmem:[%s2 + $0x2c] sm:$0xf]
        %v1124 = vld [vmem:[%s2 + $0x30] sm:$0xf]
        %v1125 = vld [vmem:[%s2 + $0x34] sm:$0xf]
        %v1126 = vld [vmem:[%s2 + $0x38] sm:$0xf]
        %v1127 = vld [vmem:[%s2 + $0x3c] sm:$0xf]
        %v1128 = vld [vmem:[%s2 + $0x40] sm:$0xf]
        %v1129 = vld [vmem:[%s2 + $0x44] sm:$0xf]
        %v1130 = vld [vmem:[%s2 + $0x48] sm:$0xf]
        %v1131 = vld [vmem:[%s2 + $0x4c] sm:$0xf]
        %v1132 = vld [vmem:[%s2 + $0x50] sm:$0xf]
        %v1133 = vld [vmem:[%s2 + $0x54] sm:$0xf]
        %v1134 = vld [vmem:[%s2 + $0x58] sm:$0xf]
        %v1135 = vld [vmem:[%s2 + $0x5c] sm:$0xf]
        %v1136 = vld [vmem:[%s2 + $0x60] sm:$0xf]
        %v1137 = vld [vmem:[%s2 + $0x64] sm:$0xf]
        %v1138 = vld [vmem:[%s2 + $0x68] sm:$0xf]
        %v1139 = vld [vmem:[%s2 + $0x6c] sm:$0xf]
        %v1140 = vld [vmem:[%s2 + $0x70] sm:$0xf]
        %v1141 = vld [vmem:[%s2 + $0x74] sm:$0xf]
        %v1142 = vld [vmem:[%s2 + $0x78] sm:$0xf]
        %v1143 = vld [vmem:[%s2 + $0x7c] sm:$0xf]
        %v1176 = vunpack.c.l.b16 %v1112
        %v1177 = vunpack.c.l.b16 %v1113
        %v1178 = vunpack.c.l.b16 %v1114
        %v1179 = vunpack.c.l.b16 %v1115
        %v1180 = vunpack.c.l.b16 %v1116
        %v1181 = vunpack.c.l.b16 %v1117
        %v1182 = vunpack.c.l.b16 %v1118
        %v1183 = vunpack.c.l.b16 %v1119
        %v1184 = vunpack.c.l.b16 %v1120
        %v1185 = vunpack.c.l.b16 %v1121
        %v1186 = vunpack.c.l.b16 %v1122
        %v1187 = vunpack.c.l.b16 %v1123
        %v1188 = vunpack.c.l.b16 %v1124
        %v1189 = vunpack.c.l.b16 %v1125
        %v1190 = vunpack.c.l.b16 %v1126
        %v1191 = vunpack.c.l.b16 %v1127
        %v1192 = vunpack.c.l.b16 %v1128
        %v1193 = vunpack.c.l.b16 %v1129
        %v1194 = vunpack.c.l.b16 %v1130
        %v1195 = vunpack.c.l.b16 %v1131
        %v1196 = vunpack.c.l.b16 %v1132
        %v1197 = vunpack.c.l.b16 %v1133
        %v1198 = vunpack.c.l.b16 %v1134
        %v1199 = vunpack.c.l.b16 %v1135
        %v1200 = vunpack.c.l.b16 %v1136
        %v1201 = vunpack.c.l.b16 %v1137
        %v1202 = vunpack.c.l.b16 %v1138
        %v1203 = vunpack.c.l.b16 %v1139
        %v1204 = vunpack.c.l.b16 %v1140
        %v1205 = vunpack.c.l.b16 %v1141
        %v1206 = vunpack.c.l.b16 %v1142
        %v1207 = vunpack.c.l.b16 %v1143
        %v1208 = vpack.c.b16 %v1177, %v1176
        %v1209 = vpack.c.b16 %v1179, %v1178
        %v1210 = vpack.c.b16 %v1181, %v1180
        %v1211 = vpack.c.b16 %v1183, %v1182
        %v1212 = vpack.c.b16 %v1185, %v1184
        %v1213 = vpack.c.b16 %v1187, %v1186
        %v1214 = vpack.c.b16 %v1189, %v1188
        %v1215 = vpack.c.b16 %v1191, %v1190
        %v1216 = vpack.c.b16 %v1193, %v1192
        %v1217 = vpack.c.b16 %v1195, %v1194
        %v1218 = vpack.c.b16 %v1197, %v1196
        %v1219 = vpack.c.b16 %v1199, %v1198
        %v1220 = vpack.c.b16 %v1201, %v1200
        %v1221 = vpack.c.b16 %v1203, %v1202
        %v1222 = vpack.c.b16 %v1205, %v1204
        %v1223 = vpack.c.b16 %v1207, %v1206
        %1240 = vmatpush.bf16.msra.mxu0 %v1215
        %1241 = vmatpush.bf16.msra.mxu0 %v1214
        %1242 = vmatpush.bf16.msra.mxu0 %v1213
        %1243 = vmatpush.bf16.msra.mxu0 %v1212
        %1244 = vmatpush.bf16.msra.mxu0 %v1211
        %1245 = vmatpush.bf16.msra.mxu0 %v1210
        %1246 = vmatpush.bf16.msra.mxu0 %v1209
        %1247 = vmatpush.bf16.msra.mxu0 %v1208
        %1248 = vmatmul.bf16.gmra.mxu0 %v1096
        %v1249 = vpop.f32.mrf.mxu0
        %v1250 = vadd.f32 0.0, %v1249
        %v1251 = vpop.f32.mrf.mxu0
        %v1252 = vadd.f32 0.0, %v1251
        %1253 = vmatmul.bf16.gmra.mxu0 %v1098
        %v1254 = vpop.f32.mrf.mxu0
        %v1255 = vadd.f32 0.0, %v1254
        %v1256 = vpop.f32.mrf.mxu0
        %v1257 = vadd.f32 0.0, %v1256
        %1258 = vmatmul.bf16.gmra.mxu0 %v1100
        %v1259 = vpop.f32.mrf.mxu0
        %v1260 = vadd.f32 0.0, %v1259
        %v1261 = vpop.f32.mrf.mxu0
        %v1262 = vadd.f32 0.0, %v1261
        %1263 = vmatmul.bf16.gmra.mxu0 %v1102
        %v1264 = vpop.f32.mrf.mxu0
        %v1265 = vadd.f32 0.0, %v1264
        %v1266 = vpop.f32.mrf.mxu0
        %v1267 = vadd.f32 0.0, %v1266
        %1268 = vmatmul.bf16.gmra.mxu0 %v1104
        %v1269 = vpop.f32.mrf.mxu0
        %v1270 = vadd.f32 0.0, %v1269
        %v1271 = vpop.f32.mrf.mxu0
        %v1272 = vadd.f32 0.0, %v1271
        %1273 = vmatmul.bf16.gmra.mxu0 %v1106
        %v1274 = vpop.f32.mrf.mxu0
        %v1275 = vadd.f32 0.0, %v1274
        %v1276 = vpop.f32.mrf.mxu0
        %v1277 = vadd.f32 0.0, %v1276
        %1278 = vmatmul.bf16.gmra.mxu0 %v1108
        %v1279 = vpop.f32.mrf.mxu0
        %v1280 = vadd.f32 0.0, %v1279
        %v1281 = vpop.f32.mrf.mxu0
        %v1282 = vadd.f32 0.0, %v1281
        %1283 = vmatmul.bf16.gmra.mxu0 %v1110
        %v1284 = vpop.f32.mrf.mxu0
        %v1285 = vadd.f32 0.0, %v1284
        %v1286 = vpop.f32.mrf.mxu0
        %v1287 = vadd.f32 0.0, %v1286
        %1288 = vdwg.mxu0
        %1289 = vmatpush.bf16.msra.mxu0 %v1223
        %1290 = vmatpush.bf16.msra.mxu0 %v1222
        %1291 = vmatpush.bf16.msra.mxu0 %v1221
        %1292 = vmatpush.bf16.msra.mxu0 %v1220
        %1293 = vmatpush.bf16.msra.mxu0 %v1219
        %1294 = vmatpush.bf16.msra.mxu0 %v1218
        %1295 = vmatpush.bf16.msra.mxu0 %v1217
        %1296 = vmatpush.bf16.msra.mxu0 %v1216
        %1297 = vmatmul.bf16.gmra.mxu0 %v1097
        %v1298 = vpop.f32.mrf.mxu0
        %v1299 = vadd.f32 %v1250, %v1298
        %v1300 = vpop.f32.mrf.mxu0
        %v1301 = vadd.f32 %v1252, %v1300
        %1302 = vmatmul.bf16.gmra.mxu0 %v1099
        %v1303 = vpop.f32.mrf.mxu0
        %v1304 = vadd.f32 %v1255, %v1303
        %v1305 = vpop.f32.mrf.mxu0
        %v1306 = vadd.f32 %v1257, %v1305
        %1307 = vmatmul.bf16.gmra.mxu0 %v1101
        %v1308 = vpop.f32.mrf.mxu0
        %v1309 = vadd.f32 %v1260, %v1308
        %v1310 = vpop.f32.mrf.mxu0
        %v1311 = vadd.f32 %v1262, %v1310
        %1312 = vmatmul.bf16.gmra.mxu0 %v1103
        %v1313 = vpop.f32.mrf.mxu0
        %v1314 = vadd.f32 %v1265, %v1313
        %v1315 = vpop.f32.mrf.mxu0
        %v1316 = vadd.f32 %v1267, %v1315
        %1317 = vmatmul.bf16.gmra.mxu0 %v1105
        %v1318 = vpop.f32.mrf.mxu0
        %v1319 = vadd.f32 %v1270, %v1318
        %v1320 = vpop.f32.mrf.mxu0
        %v1321 = vadd.f32 %v1272, %v1320
        %1322 = vmatmul.bf16.gmra.mxu0 %v1107
        %v1323 = vpop.f32.mrf.mxu0
        %v1324 = vadd.f32 %v1275, %v1323
        %v1325 = vpop.f32.mrf.mxu0
        %v1326 = vadd.f32 %v1277, %v1325
        %1327 = vmatmul.bf16.gmra.mxu0 %v1109
        %v1328 = vpop.f32.mrf.mxu0
        %v1329 = vadd.f32 %v1280, %v1328
        %v1330 = vpop.f32.mrf.mxu0
        %v1331 = vadd.f32 %v1282, %v1330
        %1332 = vmatmul.bf16.gmra.mxu0 %v1111
        %v1333 = vpop.f32.mrf.mxu0
        %v1334 = vadd.f32 %v1285, %v1333
        %v1335 = vpop.f32.mrf.mxu0
        %v1336 = vadd.f32 %v1287, %v1335
        %1337 = vdwg.mxu0
        %v1338 = vpack.c.bf16 %v1301, %v1299
        %v1339 = vpack.c.bf16 %v1306, %v1304
        %v1340 = vpack.c.bf16 %v1311, %v1309
        %v1341 = vpack.c.bf16 %v1316, %v1314
        %v1342 = vpack.c.bf16 %v1321, %v1319
        %v1343 = vpack.c.bf16 %v1326, %v1324
        %v1344 = vpack.c.bf16 %v1331, %v1329
        %v1345 = vpack.c.bf16 %v1336, %v1334
        %v1346 = vld [vmem:[%s4] sm:$0xff]
        %v1347 = vld [vmem:[%s4 + $0x8] sm:$0xff]
        %v1348 = vld [vmem:[%s4 + $0x10] sm:$0xff]
        %v1349 = vld [vmem:[%s4 + $0x18] sm:$0xff]
        %v1350 = vld [vmem:[%s4 + $0x20] sm:$0xff]
        %v1351 = vld [vmem:[%s4 + $0x28] sm:$0xff]
        %v1352 = vld [vmem:[%s4 + $0x30] sm:$0xff]
        %v1353 = vld [vmem:[%s4 + $0x38] sm:$0xff]
        %v1354 = vld [vmem:[%s4 + $0x40] sm:$0xff]
        %v1355 = vld [vmem:[%s4 + $0x48] sm:$0xff]
        %v1356 = vld [vmem:[%s4 + $0x50] sm:$0xff]
        %v1357 = vld [vmem:[%s4 + $0x58] sm:$0xff]
        %v1358 = vld [vmem:[%s4 + $0x60] sm:$0xff]
        %v1359 = vld [vmem:[%s4 + $0x68] sm:$0xff]
        %v1360 = vld [vmem:[%s4 + $0x70] sm:$0xff]
        %v1361 = vld [vmem:[%s4 + $0x78] sm:$0xff]
        %v1378 = vunpack.c.l.b16 %v1346
        %v1379 = vunpack.c.h.b16 %v1346
        %v1380 = vunpack.c.l.b16 %v1347
        %v1381 = vunpack.c.h.b16 %v1347
        %v1382 = vunpack.c.l.b16 %v1348
        %v1383 = vunpack.c.h.b16 %v1348
        %v1384 = vunpack.c.l.b16 %v1349
        %v1385 = vunpack.c.h.b16 %v1349
        %v1386 = vunpack.c.l.b16 %v1350
        %v1387 = vunpack.c.h.b16 %v1350
        %v1388 = vunpack.c.l.b16 %v1351
        %v1389 = vunpack.c.h.b16 %v1351
        %v1390 = vunpack.c.l.b16 %v1352
        %v1391 = vunpack.c.h.b16 %v1352
        %v1392 = vunpack.c.l.b16 %v1353
        %v1393 = vunpack.c.h.b16 %v1353
        %v1394 = vunpack.c.l.b16 %v1354
        %v1395 = vunpack.c.h.b16 %v1354
        %v1396 = vunpack.c.l.b16 %v1355
        %v1397 = vunpack.c.h.b16 %v1355
        %v1398 = vunpack.c.l.b16 %v1356
        %v1399 = vunpack.c.h.b16 %v1356
        %v1400 = vunpack.c.l.b16 %v1357
        %v1401 = vunpack.c.h.b16 %v1357
        %v1402 = vunpack.c.l.b16 %v1358
        %v1403 = vunpack.c.h.b16 %v1358
        %v1404 = vunpack.c.l.b16 %v1359
        %v1405 = vunpack.c.h.b16 %v1359
        %v1406 = vunpack.c.l.b16 %v1360
        %v1407 = vunpack.c.h.b16 %v1360
        %v1408 = vunpack.c.l.b16 %v1361
        %v1409 = vunpack.c.h.b16 %v1361
        %v1410 = vpack.c.b16 %v1380, %v1378
        %v1411 = vpack.c.b16 %v1381, %v1379
        %v1412 = vpack.c.b16 %v1384, %v1382
        %v1413 = vpack.c.b16 %v1385, %v1383
        %v1414 = vpack.c.b16 %v1388, %v1386
        %v1415 = vpack.c.b16 %v1389, %v1387
        %v1416 = vpack.c.b16 %v1392, %v1390
        %v1417 = vpack.c.b16 %v1393, %v1391
        %v1418 = vpack.c.b16 %v1396, %v1394
        %v1419 = vpack.c.b16 %v1397, %v1395
        %v1420 = vpack.c.b16 %v1400, %v1398
        %v1421 = vpack.c.b16 %v1401, %v1399
        %v1422 = vpack.c.b16 %v1404, %v1402
        %v1423 = vpack.c.b16 %v1405, %v1403
        %v1424 = vpack.c.b16 %v1408, %v1406
        %v1425 = vpack.c.b16 %v1409, %v1407
        %1442 = vmatpush.bf16.msra.mxu0 %v1424
        %1443 = vmatpush.bf16.msra.mxu0 %v1422
        %1444 = vmatpush.bf16.msra.mxu0 %v1420
        %1445 = vmatpush.bf16.msra.mxu0 %v1418
        %1446 = vmatpush.bf16.msra.mxu0 %v1416
        %1447 = vmatpush.bf16.msra.mxu0 %v1414
        %1448 = vmatpush.bf16.msra.mxu0 %v1412
        %1449 = vmatpush.bf16.msra.mxu0 %v1410
        %1450 = vmatmul.bf16.gmra.mxu0 %v1338
        %v1451 = vpop.f32.mrf.mxu0
        %v1452 = vadd.f32 0.0, %v1451
        %v1453 = vpop.f32.mrf.mxu0
        %v1454 = vadd.f32 0.0, %v1453
        %1455 = vmatmul.bf16.gmra.mxu0 %v1339
        %v1456 = vpop.f32.mrf.mxu0
        %v1457 = vadd.f32 0.0, %v1456
        %v1458 = vpop.f32.mrf.mxu0
        %v1459 = vadd.f32 0.0, %v1458
        %1460 = vmatmul.bf16.gmra.mxu0 %v1340
        %v1461 = vpop.f32.mrf.mxu0
        %v1462 = vadd.f32 0.0, %v1461
        %v1463 = vpop.f32.mrf.mxu0
        %v1464 = vadd.f32 0.0, %v1463
        %1465 = vmatmul.bf16.gmra.mxu0 %v1341
        %v1466 = vpop.f32.mrf.mxu0
        %v1467 = vadd.f32 0.0, %v1466
        %v1468 = vpop.f32.mrf.mxu0
        %v1469 = vadd.f32 0.0, %v1468
        %1470 = vmatmul.bf16.gmra.mxu0 %v1342
        %v1471 = vpop.f32.mrf.mxu0
        %v1472 = vadd.f32 0.0, %v1471
        %v1473 = vpop.f32.mrf.mxu0
        %v1474 = vadd.f32 0.0, %v1473
        %1475 = vmatmul.bf16.gmra.mxu0 %v1343
        %v1476 = vpop.f32.mrf.mxu0
        %v1477 = vadd.f32 0.0, %v1476
        %v1478 = vpop.f32.mrf.mxu0
        %v1479 = vadd.f32 0.0, %v1478
        %1480 = vmatmul.bf16.gmra.mxu0 %v1344
        %v1481 = vpop.f32.mrf.mxu0
        %v1482 = vadd.f32 0.0, %v1481
        %v1483 = vpop.f32.mrf.mxu0
        %v1484 = vadd.f32 0.0, %v1483
        %1485 = vmatmul.bf16.gmra.mxu0 %v1345
        %v1486 = vpop.f32.mrf.mxu0
        %v1487 = vadd.f32 0.0, %v1486
        %v1488 = vpop.f32.mrf.mxu0
        %v1489 = vadd.f32 0.0, %v1488
        %1490 = vdwg.mxu0
        %1491 = vmatpush.bf16.msra.mxu0 %v1425
        %1492 = vmatpush.bf16.msra.mxu0 %v1423
        %1493 = vmatpush.bf16.msra.mxu0 %v1421
        %1494 = vmatpush.bf16.msra.mxu0 %v1419
        %1495 = vmatpush.bf16.msra.mxu0 %v1417
        %1496 = vmatpush.bf16.msra.mxu0 %v1415
        %1497 = vmatpush.bf16.msra.mxu0 %v1413
        %1498 = vmatpush.bf16.msra.mxu0 %v1411
        %1499 = vmatmul.bf16.gmra.mxu0 %v1338
        %v1500 = vpop.f32.mrf.mxu0
        %v1501 = vadd.f32 0.0, %v1500
        %v1502 = vpop.f32.mrf.mxu0
        %v1503 = vadd.f32 0.0, %v1502
        %1504 = vmatmul.bf16.gmra.mxu0 %v1339
        %v1505 = vpop.f32.mrf.mxu0
        %v1506 = vadd.f32 0.0, %v1505
        %v1507 = vpop.f32.mrf.mxu0
        %v1508 = vadd.f32 0.0, %v1507
        %1509 = vmatmul.bf16.gmra.mxu0 %v1340
        %v1510 = vpop.f32.mrf.mxu0
        %v1511 = vadd.f32 0.0, %v1510
        %v1512 = vpop.f32.mrf.mxu0
        %v1513 = vadd.f32 0.0, %v1512
        %1514 = vmatmul.bf16.gmra.mxu0 %v1341
        %v1515 = vpop.f32.mrf.mxu0
        %v1516 = vadd.f32 0.0, %v1515
        %v1517 = vpop.f32.mrf.mxu0
        %v1518 = vadd.f32 0.0, %v1517
        %1519 = vmatmul.bf16.gmra.mxu0 %v1342
        %v1520 = vpop.f32.mrf.mxu0
        %v1521 = vadd.f32 0.0, %v1520
        %v1522 = vpop.f32.mrf.mxu0
        %v1523 = vadd.f32 0.0, %v1522
        %1524 = vmatmul.bf16.gmra.mxu0 %v1343
        %v1525 = vpop.f32.mrf.mxu0
        %v1526 = vadd.f32 0.0, %v1525
        %v1527 = vpop.f32.mrf.mxu0
        %v1528 = vadd.f32 0.0, %v1527
        %1529 = vmatmul.bf16.gmra.mxu0 %v1344
        %v1530 = vpop.f32.mrf.mxu0
        %v1531 = vadd.f32 0.0, %v1530
        %v1532 = vpop.f32.mrf.mxu0
        %v1533 = vadd.f32 0.0, %v1532
        %1534 = vmatmul.bf16.gmra.mxu0 %v1345
        %v1535 = vpop.f32.mrf.mxu0
        %v1536 = vadd.f32 0.0, %v1535
        %v1537 = vpop.f32.mrf.mxu0
        %v1538 = vadd.f32 0.0, %v1537
        %1539 = vdwg.mxu0
        %1540 = vst [vmem:[%s251] sm:$0xff] %v1452
        %1541 = vst [vmem:[%s251 + $0x8] sm:$0xff] %v1501
        %1542 = vst [vmem:[%s251 + $0x10] sm:$0xff] %v1454
        %1543 = vst [vmem:[%s251 + $0x18] sm:$0xff] %v1503
        %1544 = vst [vmem:[%s251 + $0x20] sm:$0xff] %v1457
        %1545 = vst [vmem:[%s251 + $0x28] sm:$0xff] %v1506
        %1546 = vst [vmem:[%s251 + $0x30] sm:$0xff] %v1459
        %1547 = vst [vmem:[%s251 + $0x38] sm:$0xff] %v1508
        %1548 = vst [vmem:[%s251 + $0x40] sm:$0xff] %v1462
        %1549 = vst [vmem:[%s251 + $0x48] sm:$0xff] %v1511
        %1550 = vst [vmem:[%s251 + $0x50] sm:$0xff] %v1464
        %1551 = vst [vmem:[%s251 + $0x58] sm:$0xff] %v1513
        %1552 = vst [vmem:[%s251 + $0x60] sm:$0xff] %v1467
        %1553 = vst [vmem:[%s251 + $0x68] sm:$0xff] %v1516
        %1554 = vst [vmem:[%s251 + $0x70] sm:$0xff] %v1469
        %1555 = vst [vmem:[%s251 + $0x78] sm:$0xff] %v1518
        %1556 = vst [vmem:[%s251 + $0x80] sm:$0xff] %v1472
        %1557 = vst [vmem:[%s251 + $0x88] sm:$0xff] %v1521
        %1558 = vst [vmem:[%s251 + $0x90] sm:$0xff] %v1474
        %1559 = vst [vmem:[%s251 + $0x98] sm:$0xff] %v1523
        %1560 = vst [vmem:[%s251 + $0xa0] sm:$0xff] %v1477
        %1561 = vst [vmem:[%s251 + $0xa8] sm:$0xff] %v1526
        %1562 = vst [vmem:[%s251 + $0xb0] sm:$0xff] %v1479
        %1563 = vst [vmem:[%s251 + $0xb8] sm:$0xff] %v1528
        %1564 = vst [vmem:[%s251 + $0xc0] sm:$0xff] %v1482
        %1565 = vst [vmem:[%s251 + $0xc8] sm:$0xff] %v1531
        %1566 = vst [vmem:[%s251 + $0xd0] sm:$0xff] %v1484
        %1567 = vst [vmem:[%s251 + $0xd8] sm:$0xff] %v1533
        %1568 = vst [vmem:[%s251 + $0xe0] sm:$0xff] %v1487
        %1569 = vst [vmem:[%s251 + $0xe8] sm:$0xff] %v1536
        %1570 = vst [vmem:[%s251 + $0xf0] sm:$0xff] %v1489
        %1571 = vst [vmem:[%s251 + $0xf8] sm:$0xff] %v1538
        %s1572 = sand.u32 %s142, 1
        %s1573 = scalar_lea.sflag [#allocation3], %s1572
        %s1574 = sand.u32 %s142, 1
        %s1575 = smul.addr %s1574, 256
        %s1576 = scalar_lea.vmem [#allocation2], %s1575
        %s1577 = sand.u32 %s168, 1
        %s1578 = scalar_lea.sflag [#allocation5], %s1577
        %s1579 = sand.u32 %s168, 1
        %s1580 = smul.addr %s1579, 256
        %s1581 = scalar_lea.vmem [#allocation4], %s1580
        // Predicated region
        $region41: #{self_attention_pallas.3} parent=39 // pred_check
          %p1582 = pneg %p152
        $region42: #{self_attention_pallas.3} parent=39 // pred_check_branch
          %1584 = sbr.rel (%p1582) target = $region44
        $region43: #{self_attention_pallas.3} parent=39 // pred_region
          %s1585 = smul.u32 16, %s24
          %1587 = vsyncadd %s1573, 0
          %s1588 = smul.addr %s1585, 2
          %s1589 = smul.addr %s1588, 8
          %s1590 = scalar_lea.hbm %s5, %s1589
          %s1591 = sshll.u32 %s1576, 4
          %s1592 = int_to_ptr.vmem [resolvable:$true] %s1591
          %s1593 = sshll.u32 %s1590, 4
          %s1594 = int_to_ptr.hbm [resolvable:$true] %s1593
          %1599 = dma.vmem_to_hbm [thread:$0]  %s1592, 4096, %s1594, %s1573, 256, 256, 16
        $region44: #{self_attention_pallas.3} parent=39 // pred_fallthru
          _
        // Predicated region
        $region45: #{self_attention_pallas.3} parent=39 // pred_check
          %p1600 = pneg %p178
        $region46: #{self_attention_pallas.3} parent=39 // pred_check_branch
          %1602 = sbr.rel (%p1600) target = $region48
        $region47: #{self_attention_pallas.3} parent=39 // pred_region
          %s1603 = smul.u32 16, %s24
          %1605 = vsyncadd %s1578, 0
          %s1606 = smul.addr %s1603, 2
          %s1607 = smul.addr %s1606, 8
          %s1608 = scalar_lea.hbm %s6, %s1607
          %s1609 = sshll.u32 %s1581, 4
          %s1610 = int_to_ptr.vmem [resolvable:$true] %s1609
          %s1611 = sshll.u32 %s1608, 4
          %s1612 = int_to_ptr.hbm [resolvable:$true] %s1611
          %1617 = dma.vmem_to_hbm [thread:$0]  %s1610, 4096, %s1612, %s1578, 256, 256, 16
        $region48: #{self_attention_pallas.3} parent=39 // pred_fallthru
          _
      $region40: #{self_attention_pallas.3} parent=5 // pred_fallthru
        _
      %p1618 = scmp.le.s32.totalorder 2, %s19
      // Predicated region
      $region49: #{self_attention_pallas.3} parent=5 // pred_check
        %p1619 = pneg %p1618
      $region50: #{self_attention_pallas.3} parent=5 // pred_check_branch
        %1621 = sbr.rel (%p1619) target = $region52
      $region51: #{self_attention_pallas.3} parent=5 // pred_region
        %s1622 = ssub.s32 %s19, 2
        // Predicated region
        $region53: #{self_attention_pallas.3} parent=51 // pred_check
          %p1623 = pneg %p158
        $region54: #{self_attention_pallas.3} parent=51 // pred_check_branch
          %1625 = sbr.rel (%p1623) target = $region56
        $region55: #{self_attention_pallas.3} parent=51 // pred_region
          %s1626 = sand.u32 %s143, 1
          %s1627 = scalar_lea.sflag [#allocation3], %s1626
          %s1628 = sand.u32 %s143, 1
          %s1629 = smul.addr %s1628, 256
          %s1630 = scalar_lea.vmem [#allocation2], %s1629
          %1632 = dma.done %s1627, 4096
        $region56: #{self_attention_pallas.3} parent=51 // pred_fallthru
          _
        // Predicated region
        $region57: #{self_attention_pallas.3} parent=51 // pred_check
          %p1633 = pneg %p184
        $region58: #{self_attention_pallas.3} parent=51 // pred_check_branch
          %1635 = sbr.rel (%p1633) target = $region60
        $region59: #{self_attention_pallas.3} parent=51 // pred_region
          %s1636 = sand.u32 %s169, 1
          %s1637 = scalar_lea.sflag [#allocation5], %s1636
          %s1638 = sand.u32 %s169, 1
          %s1639 = smul.addr %s1638, 256
          %s1640 = scalar_lea.vmem [#allocation4], %s1639
          %1642 = dma.done %s1637, 4096
        $region60: #{self_attention_pallas.3} parent=51 // pred_fallthru
          _
      $region52: #{self_attention_pallas.3} parent=5 // pred_fallthru
        _
    $region6: #{self_attention_pallas.3} parent=1 // loop_footer
      %s23 = sadd.s32 1, %s19
    $region7: #{self_attention_pallas.3} parent=1 // loop_footer_branch
      %18 = sbr.rel target = $region3
    $region8: #{self_attention_pallas.3} parent=1 // loop_exit
      _
    %1643 = vsyncpa [#allocation3], 1
    %s1644 = scalar_lea.sflag [#allocation3], 1
    %1645 = vsyncpa %s1644, 1
    %1646 = vsyncpa [#allocation5], 1
    %s1647 = scalar_lea.sflag [#allocation5], 1
    %1648 = vsyncpa %s1647, 1

</llo_original>
